<compile_context>
chip_gen: v5e
topology: v5e:2x2
jax: 0.10.0
libtpu: 0.0.40
codegen_flags: <defaults>
</compile_context>

<pallas_src>
import functools

import jax
import jax.numpy as jnp
from jax.experimental import pallas as pl
from jax.experimental.pallas import tpu as pltpu


def _gate_mtl_kernel(layer_ref, first_ref, last_ref, pol_ref,   # scalar-prefetch (SMEM)
                     x_ref, bw_ref, bb_ref, dw_ref, db_ref,      # inputs (VMEM)
                     out_ref,                                    # output (VMEM tile)
                     feat, ident):                               # scratch (VMEM, f32)
    # grid = (M tiles [parallel], blocks [arbitrary, sequential carry])
    b = pl.program_id(1)
    li = layer_ref[b]

    # Load the stem-feature tile once per M tile; `feat` carries across the block axis.
    @pl.when(b == 0)
    def _():
        feat[...] = x_ref[...].astype(jnp.float32)

    f = feat[...]
    f_bf = f.astype(jnp.bfloat16)            # bf16 MXU inputs, f32 accumulation

    # identity path: downsample (1x1-conv) only on the first block of a layer.
    @pl.when(first_ref[b] == 1)
    def _():
        ident[...] = (jnp.dot(f_bf, dw_ref[0], preferred_element_type=jnp.float32)
                      + db_ref[li])

    @pl.when(first_ref[b] == 0)
    def _():
        ident[...] = f

    # block(feat): synthetic 1x1-conv block body -> MXU matmul (bf16 x bf16 -> f32)
    blk = jnp.dot(f_bf, bw_ref[0], preferred_element_type=jnp.float32) + bb_ref[b]

    identity = ident[...]
    y = blk + identity

    p0 = pol_ref[b, 0]
    p1 = pol_ref[b, 1]
    # p0 * leaky_relu(y)  ==  y * where(y > 0, p0, 0.01 * p0)   (fewer full-tensor ops)
    new_feat = y * jnp.where(y > 0, p0, jnp.float32(0.01) * p0) + p1 * identity

    feat[...] = new_feat

    # Only the last block of each layer produces a return_layers feature.
    @pl.when(last_ref[b] == 1)
    def _():
        out_ref[0] = new_feat.astype(out_ref.dtype)


def gate_mtl_backbone(x_mc, blk_w, blk_b, ds_w, ds_b, policy,
                      layer_idx, is_first, is_last, num_layers, tm=256):
    """Run the gated backbone for one dataset.

    x_mc:      (M, C)    flattened NHWC stem features (f32)
    blk_w:     (N, C, C) per-block 1x1 conv weights (bf16)
    blk_b:     (N, 1, C) per-block biases (f32)
    ds_w:      (L, C, C) per-layer downsample weights (bf16)
    ds_b:      (L, 1, C) per-layer downsample biases (f32)
    policy:    (N, 2)    gating policy (f32)
    layer_idx: (N,)      int32 layer id of each block
    is_first:  (N,)      int32 1 if block is first in its layer
    is_last:   (N,)      int32 1 if block is last in its layer
    returns:   (L, M, C) layer-end features (f32)
    """
    M, C = x_mc.shape
    N = blk_w.shape[0]
    L = num_layers

    tm = min(tm, M)
    assert M % tm == 0, "row count must be divisible by the row-tile size"
    grid = (M // tm, N)

    grid_spec = pltpu.PrefetchScalarGridSpec(
        num_scalar_prefetch=4,
        grid=grid,
        in_specs=[
            # stem features, tiled over rows (re-DMA'd only when the M tile changes)
            pl.BlockSpec((tm, C), lambda m, b, lr, fr, lsr, pr: (m, 0)),
            # per-block weight (bf16)
            pl.BlockSpec((1, C, C), lambda m, b, lr, fr, lsr, pr: (b, 0, 0)),
            # all block biases resident once (no per-step tiny DMAs)
            pl.BlockSpec((N, 1, C), lambda m, b, lr, fr, lsr, pr: (0, 0, 0)),
            # per-layer downsample weight (only re-DMA'd at layer boundaries)
            pl.BlockSpec((1, C, C), lambda m, b, lr, fr, lsr, pr: (lr[b], 0, 0)),
            # all downsample biases resident once
            pl.BlockSpec((L, 1, C), lambda m, b, lr, fr, lsr, pr: (0, 0, 0)),
        ],
        out_specs=pl.BlockSpec((1, tm, C), lambda m, b, lr, fr, lsr, pr: (lr[b], m, 0)),
        scratch_shapes=[pltpu.VMEM((tm, C), jnp.float32),   # feat carry
                        pltpu.VMEM((tm, C), jnp.float32)],  # identity buffer
    )

    return pl.pallas_call(
        _gate_mtl_kernel,
        out_shape=jax.ShapeDtypeStruct((L, M, C), jnp.float32),
        grid_spec=grid_spec,
        compiler_params=pltpu.CompilerParams(
            # rows are independent (1x1 conv) -> megacore-shardable; block axis carries feat
            dimension_semantics=("parallel", "arbitrary")),
    )(layer_idx, is_first, is_last, policy, x_mc, blk_w, blk_b, ds_w, ds_b)


def gate_mtl_backbone_ref(x_mc, blk_w, blk_b, ds_w, ds_b, policy,
                          layer_idx, is_first, is_last, num_layers):
    """Pure-JAX reference mirroring GateMTL.get_features' inner loop (bf16 matmul inputs,
    f32 accumulation — same numerics as the kernel)."""
    del is_last
    feat = x_mc.astype(jnp.float32)
    outs = [None] * num_layers
    N = blk_w.shape[0]
    for b in range(N):
        li = int(layer_idx[b])
        f_bf = feat.astype(jnp.bfloat16)
        if int(is_first[b]) == 1:
            identity = (jnp.dot(f_bf, ds_w[li], preferred_element_type=jnp.float32)
                        + ds_b[li, 0])
        else:
            identity = feat
        blk = (jnp.dot(f_bf, blk_w[b], preferred_element_type=jnp.float32)
               + blk_b[b, 0])
        y = blk + identity
        block_output = jnp.where(y > 0, y, 0.01 * y)      # F.leaky_relu_ default slope
        feat = policy[b, 0] * block_output + policy[b, 1] * identity
        outs[li] = feat
    return jnp.stack(outs, axis=0)


def hard_policy(task_logits):
    """test_sample_policy(..., is_hardsampling=True): argmax over dim=1."""
    g = jnp.argmax(task_logits, axis=1)
    return jnp.stack([1 - g, g], axis=1).astype(jnp.float32)


if __name__ == "__main__":
    key = jax.random.PRNGKey(0)

    # Small, module-consistent shapes; C is lane-dense (multiple of 128).
    B, C, H, W = 2, 128, 16, 16              # PyTorch input would be NCHW (2, 128, 16, 16)
    num_per_block = [2, 2]                   # 2 layers x 2 blocks
    L = len(num_per_block)
    N = sum(num_per_block)
    M = B * H * W
    data_list = ["task_a", "task_b"]

    k_x, k_bw, k_dw, k_g0, k_g1 = jax.random.split(key, 5)

    # NCHW input -> channels-last (M, C).  # layout: NHWC / (M, C) channels-last
    x_nchw = jax.random.normal(k_x, (B, C, H, W), dtype=jnp.float32)
    x_mc = jnp.transpose(x_nchw, (0, 2, 3, 1)).reshape(M, C)

    # Deterministic kaiming-normal init for the synthetic 1x1-conv blocks
    # (init_weights: kaiming for conv weights, zero bias); weights stored in bf16.
    std = (2.0 / C) ** 0.5
    blk_w = (jax.random.normal(k_bw, (N, C, C), dtype=jnp.float32) * std).astype(jnp.bfloat16)
    blk_b = jnp.zeros((N, 1, C), dtype=jnp.float32)
    ds_w = (jax.random.normal(k_dw, (L, C, C), dtype=jnp.float32) * std).astype(jnp.bfloat16)
    ds_b = jnp.zeros((L, 1, C), dtype=jnp.float32)

    # Block metadata (layer id / first / last flags), like num_per_block bookkeeping.
    layer_idx = jnp.array(
        [li for li, nb in enumerate(num_per_block) for _ in range(nb)], dtype=jnp.int32)
    is_first = jnp.array(
        [1 if bi == 0 else 0 for nb in num_per_block for bi in range(nb)], dtype=jnp.int32)
    is_last = jnp.array(
        [1 if bi == nb - 1 else 0 for nb in num_per_block for bi in range(nb)],
        dtype=jnp.int32)

    # task_gating_params: 0.5 * ones(N, 2) (as in _make_gate), with a tiny deterministic
    # perturbation so the hard argmax policy is non-degenerate.
    gating_params = {
        "task_a": 0.5 * jnp.ones((N, 2), jnp.float32)
                  + 0.01 * jax.random.normal(k_g0, (N, 2), jnp.float32),
        "task_b": 0.5 * jnp.ones((N, 2), jnp.float32)
                  + 0.01 * jax.random.normal(k_g1, (N, 2), jnp.float32),
    }

    run = functools.partial(gate_mtl_backbone, num_layers=L, tm=256)
    ref = functools.partial(gate_mtl_backbone_ref, num_layers=L)

    ok = True
    for dset in data_list:
        policy = hard_policy(gating_params[dset])
        out = run(x_mc, blk_w, blk_b, ds_w, ds_b, policy, layer_idx, is_first, is_last)
        out = jax.block_until_ready(out)
        expected = ref(x_mc, blk_w, blk_b, ds_w, ds_b, policy, layer_idx, is_first, is_last)
        if not bool(jnp.allclose(out, expected, rtol=2e-3, atol=2e-3)):
            ok = False

    if ok:
        print("KERNEL_OK")
</pallas_src>

<mosaic_0001>
module attributes {stable_mosaic.version = 11 : i64} {
  func.func @_gate_mtl_kernel(%arg0: i32, %arg1: i32, %arg2: memref<4xi32, #tpu.memory_space<smem>>, %arg3: memref<4xi32, #tpu.memory_space<smem>>, %arg4: memref<4xi32, #tpu.memory_space<smem>>, %arg5: memref<4x2xf32, #tpu.memory_space<smem>>, %arg6: memref<256x128xf32, #tpu.memory_space<vmem>>, %arg7: memref<1x128x128xbf16, #tpu.memory_space<vmem>>, %arg8: memref<4x1x128xf32, #tpu.memory_space<vmem>>, %arg9: memref<1x128x128xbf16, #tpu.memory_space<vmem>>, %arg10: memref<2x1x128xf32, #tpu.memory_space<vmem>>, %arg11: memref<1x256x128xf32, #tpu.memory_space<vmem>>, %arg12: memref<256x128xf32, #tpu.memory_space<vmem>>, %arg13: memref<256x128xf32, #tpu.memory_space<vmem>>) attributes {dimension_semantics = [#tpu.dimension_semantics<parallel>, #tpu.dimension_semantics<arbitrary>], iteration_bounds = array<i64: 2, 4>, scalar_prefetch = 4 : i64, scratch_operands = 2 : i64, tpu.core_type = #tpu.core_type<tc>, window_params = [{transform_indices = @transform_0, window_bounds = array<i64: 256, 128>}, {transform_indices = @transform_1, window_bounds = array<i64: 1, 128, 128>}, {pipeline_mode = #tpu.pipeline_mode<synchronous>, transform_indices = @transform_2, window_bounds = array<i64: 4, 1, 128>}, {transform_indices = @transform_3, window_bounds = array<i64: 1, 128, 128>}, {pipeline_mode = #tpu.pipeline_mode<synchronous>, transform_indices = @transform_4, window_bounds = array<i64: 2, 1, 128>}, {transform_indices = @transform_5, window_bounds = array<i64: 1, 256, 128>}]} {
    %0 = arith.index_cast %arg1 : i32 to index
    %1 = memref.load %arg2[%0] : memref<4xi32, #tpu.memory_space<smem>>
    %c0_i32 = arith.constant 0 : i32
    %2 = arith.cmpi eq, %arg1, %c0_i32 : i32
    %3 = arith.extui %2 : i1 to i32
    %c0_i32_0 = arith.constant 0 : i32
    %4 = arith.cmpi ne, %3, %c0_i32_0 : i32
    scf.if %4 {
      %c0_19 = arith.constant 0 : index
      %c0_20 = arith.constant 0 : index
      %47 = vector.load %arg6[%c0_19, %c0_20] : memref<256x128xf32, #tpu.memory_space<vmem>>, vector<256x128xf32>
      %c0_21 = arith.constant 0 : index
      %c0_22 = arith.constant 0 : index
      %48 = vector.load %arg12[%c0_21, %c0_22] : memref<256x128xf32, #tpu.memory_space<vmem>>, vector<256x128xf32>
      tpu.vector_store %arg12[%c0_21, %c0_22], %47 {strides = array<i32>} : memref<256x128xf32, #tpu.memory_space<vmem>>, vector<256x128xf32>,
    } else {
    }
    %c0 = arith.constant 0 : index
    %c0_1 = arith.constant 0 : index
    %5 = vector.load %arg12[%c0, %c0_1] : memref<256x128xf32, #tpu.memory_space<vmem>>, vector<256x128xf32>
    %6 = arith.truncf %5 : vector<256x128xf32> to vector<256x128xbf16>
    %7 = arith.index_cast %arg1 : i32 to index
    %8 = memref.load %arg3[%7] : memref<4xi32, #tpu.memory_space<smem>>
    %c1_i32 = arith.constant 1 : i32
    %9 = arith.cmpi eq, %8, %c1_i32 : i32
    %10 = arith.extui %9 : i1 to i32
    %c0_i32_2 = arith.constant 0 : i32
    %11 = arith.cmpi ne, %10, %c0_i32_2 : i32
    scf.if %11 {
      %c0_19 = arith.constant 0 : index
      %c0_20 = arith.constant 0 : index
      %c0_21 = arith.constant 0 : index
      %47 = vector.load %arg9[%c0_19, %c0_20, %c0_21] : memref<1x128x128xbf16, #tpu.memory_space<vmem>>, vector<1x128x128xbf16>
      %48 = vector.shape_cast %47 : vector<1x128x128xbf16> to vector<128x128xbf16>
      %cst_22 = arith.constant dense<0.000000e+00> : vector<256x128xf32>
      %49 = tpu.matmul %6, %48, %cst_22 {dimension_numbers = #tpu.dot_dimension_numbers<[1], [0], [0], [1], [0, 0, 1, 1], [], []>} : vector<256x128xbf16>, vector<128x128xbf16>, vector<256x128xf32> -> vector<256x128xf32>
      %50 = arith.index_cast %1 : i32 to index
      %c0_23 = arith.constant 0 : index
      %c0_24 = arith.constant 0 : index
      %51 = vector.load %arg10[%50, %c0_23, %c0_24] : memref<2x1x128xf32, #tpu.memory_space<vmem>>, vector<1x1x128xf32>
      %52 = vector.shape_cast %51 : vector<1x1x128xf32> to vector<1x128xf32>
      %53 = vector.broadcast %52 : vector<1x128xf32> to vector<256x128xf32>
      %54 = arith.addf %49, %53 : vector<256x128xf32>
      %c0_25 = arith.constant 0 : index
      %c0_26 = arith.constant 0 : index
      %55 = vector.load %arg13[%c0_25, %c0_26] : memref<256x128xf32, #tpu.memory_space<vmem>>, vector<256x128xf32>
      tpu.vector_store %arg13[%c0_25, %c0_26], %54 {strides = array<i32>} : memref<256x128xf32, #tpu.memory_space<vmem>>, vector<256x128xf32>,
    } else {
    }
    %12 = arith.index_cast %arg1 : i32 to index
    %13 = memref.load %arg3[%12] : memref<4xi32, #tpu.memory_space<smem>>
    %c0_i32_3 = arith.constant 0 : i32
    %14 = arith.cmpi eq, %13, %c0_i32_3 : i32
    %15 = arith.extui %14 : i1 to i32
    %c0_i32_4 = arith.constant 0 : i32
    %16 = arith.cmpi ne, %15, %c0_i32_4 : i32
    scf.if %16 {
      %c0_19 = arith.constant 0 : index
      %c0_20 = arith.constant 0 : index
      %47 = vector.load %arg13[%c0_19, %c0_20] : memref<256x128xf32, #tpu.memory_space<vmem>>, vector<256x128xf32>
      tpu.vector_store %arg13[%c0_19, %c0_20], %5 {strides = array<i32>} : memref<256x128xf32, #tpu.memory_space<vmem>>, vector<256x128xf32>,
    } else {
    }
    %c0_5 = arith.constant 0 : index
    %c0_6 = arith.constant 0 : index
    %c0_7 = arith.constant 0 : index
    %17 = vector.load %arg7[%c0_5, %c0_6, %c0_7] : memref<1x128x128xbf16, #tpu.memory_space<vmem>>, vector<1x128x128xbf16>
    %18 = vector.shape_cast %17 : vector<1x128x128xbf16> to vector<128x128xbf16>
    %cst = arith.constant dense<0.000000e+00> : vector<256x128xf32>
    %19 = tpu.matmul %6, %18, %cst {dimension_numbers = #tpu.dot_dimension_numbers<[1], [0], [0], [1], [0, 0, 1, 1], [], []>} : vector<256x128xbf16>, vector<128x128xbf16>, vector<256x128xf32> -> vector<256x128xf32>
    %20 = arith.index_cast %arg1 : i32 to index
    %c0_8 = arith.constant 0 : index
    %c0_9 = arith.constant 0 : index
    %21 = vector.load %arg8[%20, %c0_8, %c0_9] : memref<4x1x128xf32, #tpu.memory_space<vmem>>, vector<1x1x128xf32>
    %22 = vector.shape_cast %21 : vector<1x1x128xf32> to vector<1x128xf32>
    %23 = vector.broadcast %22 : vector<1x128xf32> to vector<256x128xf32>
    %24 = arith.addf %19, %23 : vector<256x128xf32>
    %c0_10 = arith.constant 0 : index
    %c0_11 = arith.constant 0 : index
    %25 = vector.load %arg13[%c0_10, %c0_11] : memref<256x128xf32, #tpu.memory_space<vmem>>, vector<256x128xf32>
    %26 = arith.addf %24, %25 : vector<256x128xf32>
    %27 = arith.index_cast %arg1 : i32 to index
    %c0_12 = arith.constant 0 : index
    %28 = memref.load %arg5[%27, %c0_12] : memref<4x2xf32, #tpu.memory_space<smem>>
    %29 = arith.index_cast %arg1 : i32 to index
    %c1 = arith.constant 1 : index
    %30 = memref.load %arg5[%29, %c1] : memref<4x2xf32, #tpu.memory_space<smem>>
    %cst_13 = arith.constant 0.000000e+00 : f32
    %31 = vector.broadcast %cst_13 : f32 to vector<256x128xf32>
    %32 = arith.cmpf ogt, %26, %31 : vector<256x128xf32>
    %cst_14 = arith.constant 0.00999999977 : f32
    %33 = arith.mulf %cst_14, %28 : f32
    %34 = vector.broadcast %28 : f32 to vector<256x128xf32>
    %35 = vector.broadcast %33 : f32 to vector<256x128xf32>
    %36 = arith.select %32, %34, %35 : vector<256x128xi1>, vector<256x128xf32>
    %37 = arith.mulf %26, %36 : vector<256x128xf32>
    %38 = vector.broadcast %30 : f32 to vector<256x128xf32>
    %39 = arith.mulf %38, %25 : vector<256x128xf32>
    %40 = arith.addf %37, %39 : vector<256x128xf32>
    %c0_15 = arith.constant 0 : index
    %c0_16 = arith.constant 0 : index
    %41 = vector.load %arg12[%c0_15, %c0_16] : memref<256x128xf32, #tpu.memory_space<vmem>>, vector<256x128xf32>
    tpu.vector_store %arg12[%c0_15, %c0_16], %40 {strides = array<i32>} : memref<256x128xf32, #tpu.memory_space<vmem>>, vector<256x128xf32>,
    %42 = arith.index_cast %arg1 : i32 to index
    %43 = memref.load %arg4[%42] : memref<4xi32, #tpu.memory_space<smem>>
    %c1_i32_17 = arith.constant 1 : i32
    %44 = arith.cmpi eq, %43, %c1_i32_17 : i32
    %45 = arith.extui %44 : i1 to i32
    %c0_i32_18 = arith.constant 0 : i32
    %46 = arith.cmpi ne, %45, %c0_i32_18 : i32
    scf.if %46 {
      %c0_19 = arith.constant 0 : index
      %c0_20 = arith.constant 0 : index
      %c0_21 = arith.constant 0 : index
      %47 = vector.load %arg11[%c0_19, %c0_20, %c0_21] : memref<1x256x128xf32, #tpu.memory_space<vmem>>, vector<1x256x128xf32>
      %48 = vector.shape_cast %47 : vector<1x256x128xf32> to vector<256x128xf32>
      %49 = vector.shape_cast %40 : vector<256x128xf32> to vector<1x256x128xf32>
      tpu.vector_store %arg11[%c0_19, %c0_20, %c0_21], %49 {strides = array<i32>} : memref<1x256x128xf32, #tpu.memory_space<vmem>>, vector<1x256x128xf32>,
    } else {
    }
    return
  }
  func.func @transform_0(%arg0: i32, %arg1: i32, %arg2: memref<4xi32, #tpu.memory_space<smem>>, %arg3: memref<4xi32, #tpu.memory_space<smem>>, %arg4: memref<4xi32, #tpu.memory_space<smem>>, %arg5: memref<4x2xf32, #tpu.memory_space<smem>>) -> (i32, i32) {
    %c0_i32 = arith.constant 0 : i32
    %c0_i32_0 = arith.constant 0 : i32
    return %arg0, %c0_i32 : i32, i32
  }
  func.func @transform_1(%arg0: i32, %arg1: i32, %arg2: memref<4xi32, #tpu.memory_space<smem>>, %arg3: memref<4xi32, #tpu.memory_space<smem>>, %arg4: memref<4xi32, #tpu.memory_space<smem>>, %arg5: memref<4x2xf32, #tpu.memory_space<smem>>) -> (i32, i32, i32) {
    %c0_i32 = arith.constant 0 : i32
    %c0_i32_0 = arith.constant 0 : i32
    %c0_i32_1 = arith.constant 0 : i32
    return %arg1, %c0_i32, %c0_i32_0 : i32, i32, i32
  }
  func.func @transform_2(%arg0: i32, %arg1: i32, %arg2: memref<4xi32, #tpu.memory_space<smem>>, %arg3: memref<4xi32, #tpu.memory_space<smem>>, %arg4: memref<4xi32, #tpu.memory_space<smem>>, %arg5: memref<4x2xf32, #tpu.memory_space<smem>>) -> (i32, i32, i32) {
    %c0_i32 = arith.constant 0 : i32
    %c0_i32_0 = arith.constant 0 : i32
    %c0_i32_1 = arith.constant 0 : i32
    %c0_i32_2 = arith.constant 0 : i32
    return %c0_i32, %c0_i32_0, %c0_i32_1 : i32, i32, i32
  }
  func.func @transform_3(%arg0: i32, %arg1: i32, %arg2: memref<4xi32, #tpu.memory_space<smem>>, %arg3: memref<4xi32, #tpu.memory_space<smem>>, %arg4: memref<4xi32, #tpu.memory_space<smem>>, %arg5: memref<4x2xf32, #tpu.memory_space<smem>>) -> (i32, i32, i32) {
    %0 = arith.index_cast %arg1 : i32 to index
    %1 = memref.load %arg2[%0] : memref<4xi32, #tpu.memory_space<smem>>
    %c0_i32 = arith.constant 0 : i32
    %c0_i32_0 = arith.constant 0 : i32
    %c0_i32_1 = arith.constant 0 : i32
    return %1, %c0_i32, %c0_i32_0 : i32, i32, i32
  }
  func.func @transform_4(%arg0: i32, %arg1: i32, %arg2: memref<4xi32, #tpu.memory_space<smem>>, %arg3: memref<4xi32, #tpu.memory_space<smem>>, %arg4: memref<4xi32, #tpu.memory_space<smem>>, %arg5: memref<4x2xf32, #tpu.memory_space<smem>>) -> (i32, i32, i32) {
    %c0_i32 = arith.constant 0 : i32
    %c0_i32_0 = arith.constant 0 : i32
    %c0_i32_1 = arith.constant 0 : i32
    %c0_i32_2 = arith.constant 0 : i32
    return %c0_i32, %c0_i32_0, %c0_i32_1 : i32, i32, i32
  }
  func.func @transform_5(%arg0: i32, %arg1: i32, %arg2: memref<4xi32, #tpu.memory_space<smem>>, %arg3: memref<4xi32, #tpu.memory_space<smem>>, %arg4: memref<4xi32, #tpu.memory_space<smem>>, %arg5: memref<4x2xf32, #tpu.memory_space<smem>>) -> (i32, i32, i32) {
    %0 = arith.index_cast %arg1 : i32 to index
    %1 = memref.load %arg2[%0] : memref<4xi32, #tpu.memory_space<smem>>
    %c0_i32 = arith.constant 0 : i32
    %c0_i32_0 = arith.constant 0 : i32
    return %1, %arg0, %c0_i32 : i32, i32, i32
  }
}

</mosaic_0001>

<llo_original>
// kernel: tpu_custom_call.1
$region0: #{tpu_custom_call.1}
  #allocation0 [shape = 'u32[]', space=smem, size = 0x4, offset = 0x4, fixed_abs, tag = 'smem constant byte address 0x4 - core index']
  #allocation1 [shape = 'u32[72,128]{1,0:T(1,128)}', space=vmem, size = 0x9000, scoped, tag = 'internal scratch']
  #allocation2 [shape = 'f32[256,128]{1,0:T(8,128)}', space=vmem, size = 0x20000, scoped, tag = 'scratch operand']
  #allocation3 [shape = 'f32[256,128]{1,0:T(8,128)}', space=vmem, size = 0x20000, scoped, tag = 'scratch operand']
  #allocation4 [shape = 's32[1]{0}', space=sflag, size = 0x4, scoped, tag = 'scoped memory for tpu_custom_call.1']
  #allocation5 [shape = 'u8[512]{0}', space=smem, size = 0x200, scoped, tag = 'prefetched SMEM operand 0']
  #allocation6 [shape = 'u8[512]{0}', space=smem, size = 0x200, scoped, tag = 'prefetched SMEM operand 1']
  #allocation7 [shape = 'u8[512]{0}', space=smem, size = 0x200, scoped, tag = 'prefetched SMEM operand 2']
  #allocation8 [shape = 'u8[2048]{0}', space=smem, size = 0x800, scoped, tag = 'prefetched SMEM operand 3']
  %s0 = inlined_call_operand.hbm [shape: s32[4], index: 0, kind: input, shape index: {}]
  %s1 = inlined_call_operand.hbm [shape: s32[4], index: 1, kind: input, shape index: {}]
  %s2 = inlined_call_operand.hbm [shape: s32[4], index: 2, kind: input, shape index: {}]
  %s3 = inlined_call_operand.vmem [shape: f32[4,2], index: 3, kind: input, shape index: {}]
  %s4 = inlined_call_operand.hbm [shape: f32[512,128], index: 4, kind: input, shape index: {}]
  %s5 = inlined_call_operand.hbm [shape: bf16[4,128,128], index: 5, kind: input, shape index: {}]
  %s6 = inlined_call_operand.vmem [shape: f32[4,1,128], index: 6, kind: input, shape index: {}]
  %s7 = inlined_call_operand.hbm [shape: bf16[2,128,128], index: 7, kind: input, shape index: {}]
  %s8 = inlined_call_operand.vmem [shape: f32[2,1,128], index: 8, kind: input, shape index: {}]
  %s9 = inlined_call_operand.hbm [shape: f32[2,512,128], index: 9, kind: output, shape index: {}]
  %s10 = sld [smem:[#allocation0]]
  $region81: #{tpu_custom_call.1} parent=0
    _
  %s12 = ssub.s32 1, %s10
  %s13 = scalar_select 0, %s12, %s10
  %s15 = sshll.u32 %s0, 4
  %s16 = int_to_ptr.hbm [resolvable:$true] %s15
  %18 = dma.hbm_to_smem %s16, 16, [#allocation5], [#allocation4]
  %s20 = sshll.u32 %s1, 4
  %s21 = int_to_ptr.hbm [resolvable:$true] %s20
  %23 = dma.hbm_to_smem %s21, 16, [#allocation6], [#allocation4]
  %s25 = sshll.u32 %s2, 4
  %s26 = int_to_ptr.hbm [resolvable:$true] %s25
  %28 = dma.hbm_to_smem %s26, 16, [#allocation7], [#allocation4]
  %s30 = sshll.u32 %s3, 4
  %s31 = int_to_ptr.vmem [resolvable:$true] %s30
  %33 = dma.vmem_to_smem %s31, 64, [#allocation8], [#allocation4]
  %35 = dma.done [#allocation4], 112
  %36 = sfence
  $region1: #{tpu_custom_call.1} parent=0
    #allocation9 [shape = 'u8[262144]{0}', space=vmem, size = 0x40000, scoped, tag = 'input window, operand 4']
    #allocation10 [shape = 's32[2]{0}', space=sflag, size = 0x8, scoped, tag = 'scoped memory for tpu_custom_call.1']
    #allocation11 [shape = 's32[2]{0}', space=sflag, size = 0x8, scoped, tag = 'scoped memory for tpu_custom_call.1']
    #allocation12 [shape = 'u8[65536]{0}', space=vmem, size = 0x10000, scoped, tag = 'input window, operand 5']
    #allocation13 [shape = 's32[2]{0}', space=sflag, size = 0x8, scoped, tag = 'scoped memory for tpu_custom_call.1']
    #allocation14 [shape = 'u8[65536]{0}', space=vmem, size = 0x10000, scoped, tag = 'input window, operand 7']
    #allocation15 [shape = 'u8[262144]{0}', space=vmem, size = 0x40000, scoped, tag = 'output window, operand 0']
    %37 = vsyncpa [#allocation10], 0
    %s38 = scalar_lea.sflag [#allocation10], 1
    %39 = vsyncpa %s38, 0
    %40 = vsyncpa [#allocation13], 0
    %s41 = scalar_lea.sflag [#allocation13], 1
    %42 = vsyncpa %s41, 0
    %43 = vsyncpa [#allocation11], 0
    %s44 = scalar_lea.sflag [#allocation11], 1
    %45 = vsyncpa %s44, 0
    loop: start=0, step=1, limit=10
    $region2: #{tpu_custom_call.1} parent=1 // loop_pre_header
      _
    $region3: #{tpu_custom_call.1} parent=1 // loop_header
      %s47 = sphi 0, %s51
      %p48 = scmp.ge.s32.totalorder %s47, 10
      %s54 = sphi 0, %s66
      %s55 = sphi 0, %s62
      %s56 = sphi 0, %s54
      %s57 = sphi 0, %s55
      %s58 = sphi 0, %s56
      %s59 = sphi 0, %s57
      %s69 = sphi 0, %s71
      %s72 = sphi 0, %s69
      %s73 = sphi 0, %s72
      %s89 = sphi 0, %s73
      %s95 = sphi 0, %s97
      %s98 = sphi 0, %s95
      %s99 = sphi 0, %s98
      %s115 = sphi 0, %s99
      %s119 = sphi 0, %s119
      %s121 = sphi 0, %s119
      %s122 = sphi 0, %s121
      %s136 = sphi 0, %s122
      %s144 = sphi 0, %s146
      %s147 = sphi 0, %s144
      %s148 = sphi 0, %s147
      %s164 = sphi 0, %s148
      %s168 = sphi 0, %s168
      %s170 = sphi 0, %s168
      %s171 = sphi 0, %s170
      %s185 = sphi 0, %s171
      %s195 = sphi 0, %s197
      %s198 = sphi 0, %s195
      %s199 = sphi 0, %s198
      %s215 = sphi 0, %s199
    $region4: #{tpu_custom_call.1} parent=1 // loop_header_branch
      %50 = sbr.rel (%p48) target = $region8
    $region5: #{tpu_custom_call.1} parent=1 // loop_body
      %s52 = ssub.s32 %s47, 1
      %s53 = ssub.s32 %s47, 2
      %s60 = sadd.s32 1, %s55
      %p61 = scmp.ge.s32.totalorder %s60, 4
      %s62 = scalar_select %p61, 0, %s60
      %s63 = sadd.s32 1, %s54
      %s64 = scalar_select %p61, %s63, %s54
      %p65 = scmp.ge.s32.totalorder %s64, 2
      %s66 = scalar_select %p65, 0, %s64
      %s67 = ssub.s32 %s54, %s66
      %p68 = scmp.eq.s32.totalorder %s67, 0
      %s70 = sadd.s32 %s69, 1
      %s71 = scalar_select %p68, %s69, %s70
      %p74 = pneg %p68
      %p75 = scmp.eq.s32.totalorder %s47, 7
      %p76 = por %p74, %p75
      %p77 = scmp.ne.s32.totalorder %s69, %s72
      %p78 = scmp.eq.s32.totalorder %s47, 0
      %p79 = por %p77, %p78
      %p80 = scmp.ne.s32.totalorder %s69, %s72
      %p81 = scmp.eq.s32.totalorder %s52, 7
      %p82 = por %p80, %p81
      %p83 = scmp.ne.s32.totalorder %s72, %s73
      %p84 = scmp.eq.s32.totalorder %s52, 0
      %p85 = por %p83, %p84
      %p86 = scmp.ne.s32.totalorder %s72, %s73
      %p87 = scmp.eq.s32.totalorder %s53, 7
      %p88 = por %p86, %p87
      %p90 = scmp.ne.s32.totalorder %s73, %s89
      %p91 = scmp.eq.s32.totalorder %s53, 0
      %p92 = por %p90, %p91
      %s93 = ssub.s32 %s55, %s62
      %p94 = scmp.eq.s32.totalorder %s93, 0
      %s96 = sadd.s32 %s95, 1
      %s97 = scalar_select %p94, %s95, %s96
      %p100 = pneg %p94
      %p101 = scmp.eq.s32.totalorder %s47, 7
      %p102 = por %p100, %p101
      %p103 = scmp.ne.s32.totalorder %s95, %s98
      %p104 = scmp.eq.s32.totalorder %s47, 0
      %p105 = por %p103, %p104
      %p106 = scmp.ne.s32.totalorder %s95, %s98
      %p107 = scmp.eq.s32.totalorder %s52, 7
      %p108 = por %p106, %p107
      %p109 = scmp.ne.s32.totalorder %s98, %s99
      %p110 = scmp.eq.s32.totalorder %s52, 0
      %p111 = por %p109, %p110
      %p112 = scmp.ne.s32.totalorder %s98, %s99
      %p113 = scmp.eq.s32.totalorder %s53, 7
      %p114 = por %p112, %p113
      %p116 = scmp.ne.s32.totalorder %s99, %s115
      %p117 = scmp.eq.s32.totalorder %s53, 0
      %p118 = por %p116, %p117
      %s120 = sadd.s32 %s119, 1
      %p123 = scmp.eq.s32.totalorder %s47, 7
      %p124 = scmp.ne.s32.totalorder %s119, %s121
      %p125 = scmp.eq.s32.totalorder %s47, 0
      %p126 = por %p124, %p125
      %p127 = scmp.ne.s32.totalorder %s119, %s121
      %p128 = scmp.eq.s32.totalorder %s52, 7
      %p129 = por %p127, %p128
      %p130 = scmp.ne.s32.totalorder %s121, %s122
      %p131 = scmp.eq.s32.totalorder %s52, 0
      %p132 = por %p130, %p131
      %p133 = scmp.ne.s32.totalorder %s121, %s122
      %p134 = scmp.eq.s32.totalorder %s53, 7
      %p135 = por %p133, %p134
      %p137 = scmp.ne.s32.totalorder %s122, %s136
      %p138 = scmp.eq.s32.totalorder %s53, 0
      %p139 = por %p137, %p138
      %s140 = sld [smem:[#allocation5 + %s55]]
      %s141 = sld [smem:[#allocation5 + %s62]]
      %s142 = ssub.s32 %s140, %s141
      %p143 = scmp.eq.s32.totalorder %s142, 0
      %s145 = sadd.s32 %s144, 1
      %s146 = scalar_select %p143, %s144, %s145
      %p149 = pneg %p143
      %p150 = scmp.eq.s32.totalorder %s47, 7
      %p151 = por %p149, %p150
      %p152 = scmp.ne.s32.totalorder %s144, %s147
      %p153 = scmp.eq.s32.totalorder %s47, 0
      %p154 = por %p152, %p153
      %p155 = scmp.ne.s32.totalorder %s144, %s147
      %p156 = scmp.eq.s32.totalorder %s52, 7
      %p157 = por %p155, %p156
      %p158 = scmp.ne.s32.totalorder %s147, %s148
      %p159 = scmp.eq.s32.totalorder %s52, 0
      %p160 = por %p158, %p159
      %p161 = scmp.ne.s32.totalorder %s147, %s148
      %p162 = scmp.eq.s32.totalorder %s53, 7
      %p163 = por %p161, %p162
      %p165 = scmp.ne.s32.totalorder %s148, %s164
      %p166 = scmp.eq.s32.totalorder %s53, 0
      %p167 = por %p165, %p166
      %s169 = sadd.s32 %s168, 1
      %p172 = scmp.eq.s32.totalorder %s47, 7
      %p173 = scmp.ne.s32.totalorder %s168, %s170
      %p174 = scmp.eq.s32.totalorder %s47, 0
      %p175 = por %p173, %p174
      %p176 = scmp.ne.s32.totalorder %s168, %s170
      %p177 = scmp.eq.s32.totalorder %s52, 7
      %p178 = por %p176, %p177
      %p179 = scmp.ne.s32.totalorder %s170, %s171
      %p180 = scmp.eq.s32.totalorder %s52, 0
      %p181 = por %p179, %p180
      %p182 = scmp.ne.s32.totalorder %s170, %s171
      %p183 = scmp.eq.s32.totalorder %s53, 7
      %p184 = por %p182, %p183
      %p186 = scmp.ne.s32.totalorder %s171, %s185
      %p187 = scmp.eq.s32.totalorder %s53, 0
      %p188 = por %p186, %p187
      %s189 = sld [smem:[#allocation5 + %s55]]
      %s190 = sld [smem:[#allocation5 + %s62]]
      %s191 = ssub.s32 %s189, %s190
      %s192 = ssub.s32 %s54, %s66
      %s193 = sor.u32 %s191, %s192
      %p194 = scmp.eq.s32.totalorder %s193, 0
      %s196 = sadd.s32 %s195, 1
      %s197 = scalar_select %p194, %s195, %s196
      %p200 = pneg %p194
      %p201 = scmp.eq.s32.totalorder %s47, 7
      %p202 = por %p200, %p201
      %p203 = scmp.ne.s32.totalorder %s195, %s198
      %p204 = scmp.eq.s32.totalorder %s47, 0
      %p205 = por %p203, %p204
      %p206 = scmp.ne.s32.totalorder %s195, %s198
      %p207 = scmp.eq.s32.totalorder %s52, 7
      %p208 = por %p206, %p207
      %p209 = scmp.ne.s32.totalorder %s198, %s199
      %p210 = scmp.eq.s32.totalorder %s52, 0
      %p211 = por %p209, %p210
      %p212 = scmp.ne.s32.totalorder %s198, %s199
      %p213 = scmp.eq.s32.totalorder %s53, 7
      %p214 = por %p212, %p213
      %p216 = scmp.ne.s32.totalorder %s199, %s215
      %p217 = scmp.eq.s32.totalorder %s53, 0
      %p218 = por %p216, %p217
      %p219 = scmp.le.s32.totalorder 1, %s47
      %p220 = scmp.lt.s32.totalorder %s47, 9
      %p221 = pnand %p219, %p220
      %p222 = pneg %p221
      // Predicated region
      $region9: #{tpu_custom_call.1} parent=5 // pred_check
        _
      $region10: #{tpu_custom_call.1} parent=5 // pred_check_branch
        %224 = sbr.rel (%p221) target = $region12
      $region11: #{tpu_custom_call.1} parent=5 // pred_region
        %s225 = ssub.s32 %s47, 1
        // Predicated region
        $region13: #{tpu_custom_call.1} parent=11 // pred_check
          %p226 = pneg %p132
        $region14: #{tpu_custom_call.1} parent=11 // pred_check_branch
          %228 = sbr.rel (%p226) target = $region16
        $region15: #{tpu_custom_call.1} parent=11 // pred_region
          _
        $region16: #{tpu_custom_call.1} parent=11 // pred_fallthru
          _
        // Predicated region
        $region17: #{tpu_custom_call.1} parent=11 // pred_check
          %p229 = pneg %p181
        $region18: #{tpu_custom_call.1} parent=11 // pred_check_branch
          %231 = sbr.rel (%p229) target = $region20
        $region19: #{tpu_custom_call.1} parent=11 // pred_region
          _
        $region20: #{tpu_custom_call.1} parent=11 // pred_fallthru
          _
      $region12: #{tpu_custom_call.1} parent=5 // pred_fallthru
        _
      %p232 = scmp.lt.s32.totalorder %s47, 8
      // Predicated region
      $region21: #{tpu_custom_call.1} parent=5 // pred_check
        %p233 = pneg %p232
      $region22: #{tpu_custom_call.1} parent=5 // pred_check_branch
        %235 = sbr.rel (%p233) target = $region24
      $region23: #{tpu_custom_call.1} parent=5 // pred_region
        // Predicated region
        $region25: #{tpu_custom_call.1} parent=23 // pred_check
          %p236 = pneg %p79
        $region26: #{tpu_custom_call.1} parent=23 // pred_check_branch
          %238 = sbr.rel (%p236) target = $region28
        $region27: #{tpu_custom_call.1} parent=23 // pred_region
          %s239 = sand.u32 %s69, 1
          %s240 = scalar_lea.sflag [#allocation10], %s239
          %s241 = sand.u32 %s69, 1
          %s242 = smul.addr %s241, 256
          %s243 = scalar_lea.vmem [#allocation9], %s242
          %s244 = smul.u32 32, %s54
          %246 = vsyncadd %s240, 0
          %s247 = smul.addr %s244, 8
          %s248 = scalar_lea.hbm %s4, %s247
          %s249 = sshll.u32 %s248, 4
          %s250 = int_to_ptr.hbm [resolvable:$true] %s249
          %s251 = sshll.u32 %s243, 4
          %s252 = int_to_ptr.vmem [resolvable:$true] %s251
          %257 = dma.hbm_to_vmem [thread:$0]  %s250, 4096, %s252, %s240, 128, 128, 8
        $region28: #{tpu_custom_call.1} parent=23 // pred_fallthru
          _
        // Predicated region
        $region29: #{tpu_custom_call.1} parent=23 // pred_check
          %p258 = pneg %p105
        $region30: #{tpu_custom_call.1} parent=23 // pred_check_branch
          %260 = sbr.rel (%p258) target = $region32
        $region31: #{tpu_custom_call.1} parent=23 // pred_region
          %s261 = sand.u32 %s47, 1
          %s262 = scalar_lea.sflag [#allocation13], %s261
          %s263 = sand.u32 %s95, 1
          %s264 = smul.addr %s263, 64
          %s265 = scalar_lea.vmem [#allocation12], %s264
          %267 = vsyncadd %s262, 0
          %s268 = smul.addr %s55, 16
          %s269 = smul.addr %s268, 4
          %s270 = scalar_lea.hbm %s5, %s269
          %s271 = sshll.u32 %s270, 4
          %s272 = int_to_ptr.hbm [resolvable:$true] %s271
          %s273 = sshll.u32 %s265, 4
          %s274 = int_to_ptr.vmem [resolvable:$true] %s273
          %279 = dma.hbm_to_vmem [thread:$0]  %s272, 1024, %s274, %s262, 64, 64, 4
        $region32: #{tpu_custom_call.1} parent=23 // pred_fallthru
          _
        // Predicated region
        $region33: #{tpu_custom_call.1} parent=23 // pred_check
          %p280 = pneg %p154
        $region34: #{tpu_custom_call.1} parent=23 // pred_check_branch
          %282 = sbr.rel (%p280) target = $region36
        $region35: #{tpu_custom_call.1} parent=23 // pred_region
          %s283 = sand.u32 %s47, 1
          %s284 = scalar_lea.sflag [#allocation13], %s283
          %s285 = sand.u32 %s144, 1
          %s286 = smul.addr %s285, 64
          %s287 = scalar_lea.vmem [#allocation14], %s286
          %s288 = sld [smem:[#allocation5 + %s55]]
          %290 = vsyncadd %s284, 0
          %s291 = smul.addr %s288, 16
          %s292 = smul.addr %s291, 4
          %s293 = scalar_lea.hbm %s7, %s292
          %s294 = sshll.u32 %s293, 4
          %s295 = int_to_ptr.hbm [resolvable:$true] %s294
          %s296 = sshll.u32 %s287, 4
          %s297 = int_to_ptr.vmem [resolvable:$true] %s296
          %302 = dma.hbm_to_vmem [thread:$0]  %s295, 1024, %s297, %s284, 64, 64, 4
        $region36: #{tpu_custom_call.1} parent=23 // pred_fallthru
          _
      $region24: #{tpu_custom_call.1} parent=5 // pred_fallthru
        _
      %p303 = scmp.le.s32.totalorder 1, %s47
      %p304 = scmp.lt.s32.totalorder %s47, 9
      %p305 = pnand %p303, %p304
      %p306 = pneg %p305
      // Predicated region
      $region37: #{tpu_custom_call.1} parent=5 // pred_check
        _
      $region38: #{tpu_custom_call.1} parent=5 // pred_check_branch
        %308 = sbr.rel (%p305) target = $region40
      $region39: #{tpu_custom_call.1} parent=5 // pred_region
        %s309 = ssub.s32 %s47, 1
        %s310 = sand.u32 %s72, 1
        %s311 = scalar_lea.sflag [#allocation10], %s310
        %s312 = sand.u32 %s72, 1
        %s313 = smul.addr %s312, 256
        %s314 = scalar_lea.vmem [#allocation9], %s313
        // Predicated region
        $region41: #{tpu_custom_call.1} parent=39 // pred_check
          %p315 = pneg %p85
        $region42: #{tpu_custom_call.1} parent=39 // pred_check_branch
          %317 = sbr.rel (%p315) target = $region44
        $region43: #{tpu_custom_call.1} parent=39 // pred_region
          %319 = dma.done %s311, 4096
        $region44: #{tpu_custom_call.1} parent=39 // pred_fallthru
          _
        %s320 = sand.u32 %s52, 1
        %s321 = scalar_lea.sflag [#allocation13], %s320
        %s322 = sand.u32 %s98, 1
        %s323 = smul.addr %s322, 64
        %s324 = scalar_lea.vmem [#allocation12], %s323
        // Predicated region
        $region45: #{tpu_custom_call.1} parent=39 // pred_check
          %p325 = pneg %p111
        $region46: #{tpu_custom_call.1} parent=39 // pred_check_branch
          %327 = sbr.rel (%p325) target = $region48
        $region47: #{tpu_custom_call.1} parent=39 // pred_region
          %329 = dma.done %s321, 1024
        $region48: #{tpu_custom_call.1} parent=39 // pred_fallthru
          _
        %s330 = sand.u32 %s52, 1
        %s331 = scalar_lea.sflag [#allocation13], %s330
        %s332 = sand.u32 %s147, 1
        %s333 = smul.addr %s332, 64
        %s334 = scalar_lea.vmem [#allocation14], %s333
        // Predicated region
        $region49: #{tpu_custom_call.1} parent=39 // pred_check
          %p335 = pneg %p160
        $region50: #{tpu_custom_call.1} parent=39 // pred_check_branch
          %337 = sbr.rel (%p335) target = $region52
        $region51: #{tpu_custom_call.1} parent=39 // pred_region
          %339 = dma.done %s331, 1024
        $region52: #{tpu_custom_call.1} parent=39 // pred_fallthru
          _
        %s340 = sand.u32 %s72, 1
        %s341 = scalar_lea.sflag [#allocation10], %s340
        %s342 = sand.u32 %s72, 1
        %s343 = smul.addr %s342, 256
        %s344 = scalar_lea.vmem [#allocation9], %s343
        %p345 = pneg %p85
        %p346 = pneg %p82
        %s347 = sand.u32 %s52, 1
        %s348 = scalar_lea.sflag [#allocation13], %s347
        %s349 = sand.u32 %s98, 1
        %s350 = smul.addr %s349, 64
        %s351 = scalar_lea.vmem [#allocation12], %s350
        %p352 = pneg %p111
        %p353 = pneg %p108
        %p354 = pneg %p132
        %p355 = pneg %p129
        %s356 = sand.u32 %s52, 1
        %s357 = scalar_lea.sflag [#allocation13], %s356
        %s358 = sand.u32 %s147, 1
        %s359 = smul.addr %s358, 64
        %s360 = scalar_lea.vmem [#allocation14], %s359
        %p361 = pneg %p160
        %p362 = pneg %p157
        %p363 = pneg %p181
        %p364 = pneg %p178
        %p365 = pneg %p211
        %p366 = pneg %p208
        %s367 = sand.u32 %s198, 1
        %s368 = scalar_lea.sflag [#allocation11], %s367
        %s369 = sand.u32 %s198, 1
        %s370 = smul.addr %s369, 256
        %s371 = scalar_lea.vmem [#allocation15], %s370
        %s372 = smul.u32 32, %s56
        %s373 = sld [smem:[#allocation5 + %s57]]
        %s374 = sld [smem:[#allocation5 + %s57]]
        %s375 = smul.u32 32, %s56
        %s376 = sld [smem:[#allocation5 + %s57]]
        %p377 = scmp.eq.s32.totalorder %s57, 0
        // Predicated region
        $region53: #{tpu_custom_call.1} parent=39 // pred_check
          %p378 = pneg %p377
        $region54: #{tpu_custom_call.1} parent=39 // pred_check_branch
          %380 = sbr.rel (%p378) target = $region56
        $region55: #{tpu_custom_call.1} parent=39 // pred_region
          %v381 = vld [vmem:[%s314] sm:$0xff]
          %v382 = vld [vmem:[%s314 + $0x8] sm:$0xff]
          %v383 = vld [vmem:[%s314 + $0x10] sm:$0xff]
          %v384 = vld [vmem:[%s314 + $0x18] sm:$0xff]
          %v385 = vld [vmem:[%s314 + $0x20] sm:$0xff]
          %v386 = vld [vmem:[%s314 + $0x28] sm:$0xff]
          %v387 = vld [vmem:[%s314 + $0x30] sm:$0xff]
          %v388 = vld [vmem:[%s314 + $0x38] sm:$0xff]
          %v389 = vld [vmem:[%s314 + $0x40] sm:$0xff]
          %v390 = vld [vmem:[%s314 + $0x48] sm:$0xff]
          %v391 = vld [vmem:[%s314 + $0x50] sm:$0xff]
          %v392 = vld [vmem:[%s314 + $0x58] sm:$0xff]
          %v393 = vld [vmem:[%s314 + $0x60] sm:$0xff]
          %v394 = vld [vmem:[%s314 + $0x68] sm:$0xff]
          %v395 = vld [vmem:[%s314 + $0x70] sm:$0xff]
          %v396 = vld [vmem:[%s314 + $0x78] sm:$0xff]
          %v397 = vld [vmem:[%s314 + $0x80] sm:$0xff]
          %v398 = vld [vmem:[%s314 + $0x88] sm:$0xff]
          %v399 = vld [vmem:[%s314 + $0x90] sm:$0xff]
          %v400 = vld [vmem:[%s314 + $0x98] sm:$0xff]
          %v401 = vld [vmem:[%s314 + $0xa0] sm:$0xff]
          %v402 = vld [vmem:[%s314 + $0xa8] sm:$0xff]
          %v403 = vld [vmem:[%s314 + $0xb0] sm:$0xff]
          %v404 = vld [vmem:[%s314 + $0xb8] sm:$0xff]
          %v405 = vld [vmem:[%s314 + $0xc0] sm:$0xff]
          %v406 = vld [vmem:[%s314 + $0xc8] sm:$0xff]
          %v407 = vld [vmem:[%s314 + $0xd0] sm:$0xff]
          %v408 = vld [vmem:[%s314 + $0xd8] sm:$0xff]
          %v409 = vld [vmem:[%s314 + $0xe0] sm:$0xff]
          %v410 = vld [vmem:[%s314 + $0xe8] sm:$0xff]
          %v411 = vld [vmem:[%s314 + $0xf0] sm:$0xff]
          %v412 = vld [vmem:[%s314 + $0xf8] sm:$0xff]
          %413 = vst [vmem:[#allocation2] sm:$0xff] %v381
          %414 = vst [vmem:[#allocation2 + $0x8] sm:$0xff] %v382
          %415 = vst [vmem:[#allocation2 + $0x10] sm:$0xff] %v383
          %416 = vst [vmem:[#allocation2 + $0x18] sm:$0xff] %v384
          %417 = vst [vmem:[#allocation2 + $0x20] sm:$0xff] %v385
          %418 = vst [vmem:[#allocation2 + $0x28] sm:$0xff] %v386
          %419 = vst [vmem:[#allocation2 + $0x30] sm:$0xff] %v387
          %420 = vst [vmem:[#allocation2 + $0x38] sm:$0xff] %v388
          %421 = vst [vmem:[#allocation2 + $0x40] sm:$0xff] %v389
          %422 = vst [vmem:[#allocation2 + $0x48] sm:$0xff] %v390
          %423 = vst [vmem:[#allocation2 + $0x50] sm:$0xff] %v391
          %424 = vst [vmem:[#allocation2 + $0x58] sm:$0xff] %v392
          %425 = vst [vmem:[#allocation2 + $0x60] sm:$0xff] %v393
          %426 = vst [vmem:[#allocation2 + $0x68] sm:$0xff] %v394
          %427 = vst [vmem:[#allocation2 + $0x70] sm:$0xff] %v395
          %428 = vst [vmem:[#allocation2 + $0x78] sm:$0xff] %v396
          %429 = vst [vmem:[#allocation2 + $0x80] sm:$0xff] %v397
          %430 = vst [vmem:[#allocation2 + $0x88] sm:$0xff] %v398
          %431 = vst [vmem:[#allocation2 + $0x90] sm:$0xff] %v399
          %432 = vst [vmem:[#allocation2 + $0x98] sm:$0xff] %v400
          %433 = vst [vmem:[#allocation2 + $0xa0] sm:$0xff] %v401
          %434 = vst [vmem:[#allocation2 + $0xa8] sm:$0xff] %v402
          %435 = vst [vmem:[#allocation2 + $0xb0] sm:$0xff] %v403
          %436 = vst [vmem:[#allocation2 + $0xb8] sm:$0xff] %v404
          %437 = vst [vmem:[#allocation2 + $0xc0] sm:$0xff] %v405
          %438 = vst [vmem:[#allocation2 + $0xc8] sm:$0xff] %v406
          %439 = vst [vmem:[#allocation2 + $0xd0] sm:$0xff] %v407
          %440 = vst [vmem:[#allocation2 + $0xd8] sm:$0xff] %v408
          %441 = vst [vmem:[#allocation2 + $0xe0] sm:$0xff] %v409
          %442 = vst [vmem:[#allocation2 + $0xe8] sm:$0xff] %v410
          %443 = vst [vmem:[#allocation2 + $0xf0] sm:$0xff] %v411
          %444 = vst [vmem:[#allocation2 + $0xf8] sm:$0xff] %v412
        $region56: #{tpu_custom_call.1} parent=39 // pred_fallthru
          _
        %v445 = vld [vmem:[#allocation2] sm:$0xff]
        %v446 = vld [vmem:[#allocation2 + $0x8] sm:$0xff]
        %v447 = vld [vmem:[#allocation2 + $0x10] sm:$0xff]
        %v448 = vld [vmem:[#allocation2 + $0x18] sm:$0xff]
        %v449 = vld [vmem:[#allocation2 + $0x20] sm:$0xff]
        %v450 = vld [vmem:[#allocation2 + $0x28] sm:$0xff]
        %v451 = vld [vmem:[#allocation2 + $0x30] sm:$0xff]
        %v452 = vld [vmem:[#allocation2 + $0x38] sm:$0xff]
        %v453 = vld [vmem:[#allocation2 + $0x40] sm:$0xff]
        %v454 = vld [vmem:[#allocation2 + $0x48] sm:$0xff]
        %v455 = vld [vmem:[#allocation2 + $0x50] sm:$0xff]
        %v456 = vld [vmem:[#allocation2 + $0x58] sm:$0xff]
        %v457 = vld [vmem:[#allocation2 + $0x60] sm:$0xff]
        %v458 = vld [vmem:[#allocation2 + $0x68] sm:$0xff]
        %v459 = vld [vmem:[#allocation2 + $0x70] sm:$0xff]
        %v460 = vld [vmem:[#allocation2 + $0x78] sm:$0xff]
        %v461 = vld [vmem:[#allocation2 + $0x80] sm:$0xff]
        %v462 = vld [vmem:[#allocation2 + $0x88] sm:$0xff]
        %v463 = vld [vmem:[#allocation2 + $0x90] sm:$0xff]
        %v464 = vld [vmem:[#allocation2 + $0x98] sm:$0xff]
        %v465 = vld [vmem:[#allocation2 + $0xa0] sm:$0xff]
        %v466 = vld [vmem:[#allocation2 + $0xa8] sm:$0xff]
        %v467 = vld [vmem:[#allocation2 + $0xb0] sm:$0xff]
        %v468 = vld [vmem:[#allocation2 + $0xb8] sm:$0xff]
        %v469 = vld [vmem:[#allocation2 + $0xc0] sm:$0xff]
        %v470 = vld [vmem:[#allocation2 + $0xc8] sm:$0xff]
        %v471 = vld [vmem:[#allocation2 + $0xd0] sm:$0xff]
        %v472 = vld [vmem:[#allocation2 + $0xd8] sm:$0xff]
        %v473 = vld [vmem:[#allocation2 + $0xe0] sm:$0xff]
        %v474 = vld [vmem:[#allocation2 + $0xe8] sm:$0xff]
        %v475 = vld [vmem:[#allocation2 + $0xf0] sm:$0xff]
        %v476 = vld [vmem:[#allocation2 + $0xf8] sm:$0xff]
        %v477 = vpack.c.bf16 %v446, %v445
        %v478 = vpack.c.bf16 %v448, %v447
        %v479 = vpack.c.bf16 %v450, %v449
        %v480 = vpack.c.bf16 %v452, %v451
        %v481 = vpack.c.bf16 %v454, %v453
        %v482 = vpack.c.bf16 %v456, %v455
        %v483 = vpack.c.bf16 %v458, %v457
        %v484 = vpack.c.bf16 %v460, %v459
        %v485 = vpack.c.bf16 %v462, %v461
        %v486 = vpack.c.bf16 %v464, %v463
        %v487 = vpack.c.bf16 %v466, %v465
        %v488 = vpack.c.bf16 %v468, %v467
        %v489 = vpack.c.bf16 %v470, %v469
        %v490 = vpack.c.bf16 %v472, %v471
        %v491 = vpack.c.bf16 %v474, %v473
        %v492 = vpack.c.bf16 %v476, %v475
        %s493 = sld [smem:[#allocation6 + %s57]]
        %p494 = scmp.eq.s32.totalorder %s493, 1
        // Predicated region
        $region57: #{tpu_custom_call.1} parent=39 // pred_check
          %p495 = pneg %p494
        $region58: #{tpu_custom_call.1} parent=39 // pred_check_branch
          %497 = sbr.rel (%p495) target = $region60
        $region59: #{tpu_custom_call.1} parent=39 // pred_region
          %v498 = vld [vmem:[%s334] sm:$0xf]
          %v499 = vld [vmem:[%s334 + $0x4] sm:$0xf]
          %v500 = vld [vmem:[%s334 + $0x8] sm:$0xf]
          %v501 = vld [vmem:[%s334 + $0xc] sm:$0xf]
          %v502 = vld [vmem:[%s334 + $0x10] sm:$0xf]
          %v503 = vld [vmem:[%s334 + $0x14] sm:$0xf]
          %v504 = vld [vmem:[%s334 + $0x18] sm:$0xf]
          %v505 = vld [vmem:[%s334 + $0x1c] sm:$0xf]
          %v506 = vld [vmem:[%s334 + $0x20] sm:$0xf]
          %v507 = vld [vmem:[%s334 + $0x24] sm:$0xf]
          %v508 = vld [vmem:[%s334 + $0x28] sm:$0xf]
          %v509 = vld [vmem:[%s334 + $0x2c] sm:$0xf]
          %v510 = vld [vmem:[%s334 + $0x30] sm:$0xf]
          %v511 = vld [vmem:[%s334 + $0x34] sm:$0xf]
          %v512 = vld [vmem:[%s334 + $0x38] sm:$0xf]
          %v513 = vld [vmem:[%s334 + $0x3c] sm:$0xf]
          %s514 = scalar_lea.vmem %s8, %s376
          %v515 = vld [vmem:[%s514] sm:$0x1]
          %v517 = vperm.slane %v515, 0
          %v535 = vunpack.c.l.b16 %v498
          %v536 = vunpack.c.l.b16 %v499
          %v537 = vunpack.c.l.b16 %v500
          %v538 = vunpack.c.l.b16 %v501
          %v539 = vunpack.c.l.b16 %v502
          %v540 = vunpack.c.l.b16 %v503
          %v541 = vunpack.c.l.b16 %v504
          %v542 = vunpack.c.l.b16 %v505
          %v543 = vunpack.c.l.b16 %v506
          %v544 = vunpack.c.l.b16 %v507
          %v545 = vunpack.c.l.b16 %v508
          %v546 = vunpack.c.l.b16 %v509
          %v547 = vunpack.c.l.b16 %v510
          %v548 = vunpack.c.l.b16 %v511
          %v549 = vunpack.c.l.b16 %v512
          %v550 = vunpack.c.l.b16 %v513
          %v551 = vpack.c.b16 %v536, %v535
          %v552 = vpack.c.b16 %v538, %v537
          %v553 = vpack.c.b16 %v540, %v539
          %v554 = vpack.c.b16 %v542, %v541
          %v555 = vpack.c.b16 %v544, %v543
          %v556 = vpack.c.b16 %v546, %v545
          %v557 = vpack.c.b16 %v548, %v547
          %v558 = vpack.c.b16 %v550, %v549
          %567 = vmatpush.bf16.msra.mxu0 %v558
          %568 = vmatpush.bf16.msra.mxu0 %v557
          %569 = vmatpush.bf16.msra.mxu0 %v556
          %570 = vmatpush.bf16.msra.mxu0 %v555
          %571 = vmatpush.bf16.msra.mxu0 %v554
          %572 = vmatpush.bf16.msra.mxu0 %v553
          %573 = vmatpush.bf16.msra.mxu0 %v552
          %574 = vmatpush.bf16.msra.mxu0 %v551
          %575 = vmatmul.bf16.gmra.mxu0 %v477
          %v576 = vpop.f32.mrf.mxu0
          %v577 = vadd.f32 %v517, %v576
          %v578 = vpop.f32.mrf.mxu0
          %v579 = vadd.f32 %v517, %v578
          %580 = vmatmul.bf16.gmra.mxu0 %v478
          %v581 = vpop.f32.mrf.mxu0
          %v582 = vadd.f32 %v517, %v581
          %v583 = vpop.f32.mrf.mxu0
          %v584 = vadd.f32 %v517, %v583
          %585 = vmatmul.bf16.gmra.mxu0 %v479
          %v586 = vpop.f32.mrf.mxu0
          %v587 = vadd.f32 %v517, %v586
          %v588 = vpop.f32.mrf.mxu0
          %v589 = vadd.f32 %v517, %v588
          %590 = vmatmul.bf16.gmra.mxu0 %v480
          %v591 = vpop.f32.mrf.mxu0
          %v592 = vadd.f32 %v517, %v591
          %v593 = vpop.f32.mrf.mxu0
          %v594 = vadd.f32 %v517, %v593
          %595 = vmatmul.bf16.gmra.mxu0 %v481
          %v596 = vpop.f32.mrf.mxu0
          %v597 = vadd.f32 %v517, %v596
          %v598 = vpop.f32.mrf.mxu0
          %v599 = vadd.f32 %v517, %v598
          %600 = vmatmul.bf16.gmra.mxu0 %v482
          %v601 = vpop.f32.mrf.mxu0
          %v602 = vadd.f32 %v517, %v601
          %v603 = vpop.f32.mrf.mxu0
          %v604 = vadd.f32 %v517, %v603
          %605 = vmatmul.bf16.gmra.mxu0 %v483
          %v606 = vpop.f32.mrf.mxu0
          %v607 = vadd.f32 %v517, %v606
          %v608 = vpop.f32.mrf.mxu0
          %v609 = vadd.f32 %v517, %v608
          %610 = vmatmul.bf16.gmra.mxu0 %v484
          %v611 = vpop.f32.mrf.mxu0
          %v612 = vadd.f32 %v517, %v611
          %v613 = vpop.f32.mrf.mxu0
          %v614 = vadd.f32 %v517, %v613
          %615 = vmatmul.bf16.gmra.mxu0 %v485
          %v616 = vpop.f32.mrf.mxu0
          %v617 = vadd.f32 %v517, %v616
          %v618 = vpop.f32.mrf.mxu0
          %v619 = vadd.f32 %v517, %v618
          %620 = vmatmul.bf16.gmra.mxu0 %v486
          %v621 = vpop.f32.mrf.mxu0
          %v622 = vadd.f32 %v517, %v621
          %v623 = vpop.f32.mrf.mxu0
          %v624 = vadd.f32 %v517, %v623
          %625 = vmatmul.bf16.gmra.mxu0 %v487
          %v626 = vpop.f32.mrf.mxu0
          %v627 = vadd.f32 %v517, %v626
          %v628 = vpop.f32.mrf.mxu0
          %v629 = vadd.f32 %v517, %v628
          %630 = vmatmul.bf16.gmra.mxu0 %v488
          %v631 = vpop.f32.mrf.mxu0
          %v632 = vadd.f32 %v517, %v631
          %v633 = vpop.f32.mrf.mxu0
          %v634 = vadd.f32 %v517, %v633
          %635 = vmatmul.bf16.gmra.mxu0 %v489
          %v636 = vpop.f32.mrf.mxu0
          %v637 = vadd.f32 %v517, %v636
          %v638 = vpop.f32.mrf.mxu0
          %v639 = vadd.f32 %v517, %v638
          %640 = vmatmul.bf16.gmra.mxu0 %v490
          %v641 = vpop.f32.mrf.mxu0
          %v642 = vadd.f32 %v517, %v641
          %v643 = vpop.f32.mrf.mxu0
          %v644 = vadd.f32 %v517, %v643
          %645 = vmatmul.bf16.gmra.mxu0 %v491
          %v646 = vpop.f32.mrf.mxu0
          %v647 = vadd.f32 %v517, %v646
          %v648 = vpop.f32.mrf.mxu0
          %v649 = vadd.f32 %v517, %v648
          %650 = vmatmul.bf16.gmra.mxu0 %v492
          %v651 = vpop.f32.mrf.mxu0
          %v652 = vadd.f32 %v517, %v651
          %v653 = vpop.f32.mrf.mxu0
          %v654 = vadd.f32 %v517, %v653
          %655 = vdwg.mxu0
          %656 = vst [vmem:[#allocation3] sm:$0xff] %v577
          %657 = vst [vmem:[#allocation3 + $0x8] sm:$0xff] %v579
          %658 = vst [vmem:[#allocation3 + $0x10] sm:$0xff] %v582
          %659 = vst [vmem:[#allocation3 + $0x18] sm:$0xff] %v584
          %660 = vst [vmem:[#allocation3 + $0x20] sm:$0xff] %v587
          %661 = vst [vmem:[#allocation3 + $0x28] sm:$0xff] %v589
          %662 = vst [vmem:[#allocation3 + $0x30] sm:$0xff] %v592
          %663 = vst [vmem:[#allocation3 + $0x38] sm:$0xff] %v594
          %664 = vst [vmem:[#allocation3 + $0x40] sm:$0xff] %v597
          %665 = vst [vmem:[#allocation3 + $0x48] sm:$0xff] %v599
          %666 = vst [vmem:[#allocation3 + $0x50] sm:$0xff] %v602
          %667 = vst [vmem:[#allocation3 + $0x58] sm:$0xff] %v604
          %668 = vst [vmem:[#allocation3 + $0x60] sm:$0xff] %v607
          %669 = vst [vmem:[#allocation3 + $0x68] sm:$0xff] %v609
          %670 = vst [vmem:[#allocation3 + $0x70] sm:$0xff] %v612
          %671 = vst [vmem:[#allocation3 + $0x78] sm:$0xff] %v614
          %672 = vst [vmem:[#allocation3 + $0x80] sm:$0xff] %v617
          %673 = vst [vmem:[#allocation3 + $0x88] sm:$0xff] %v619
          %674 = vst [vmem:[#allocation3 + $0x90] sm:$0xff] %v622
          %675 = vst [vmem:[#allocation3 + $0x98] sm:$0xff] %v624
          %676 = vst [vmem:[#allocation3 + $0xa0] sm:$0xff] %v627
          %677 = vst [vmem:[#allocation3 + $0xa8] sm:$0xff] %v629
          %678 = vst [vmem:[#allocation3 + $0xb0] sm:$0xff] %v632
          %679 = vst [vmem:[#allocation3 + $0xb8] sm:$0xff] %v634
          %680 = vst [vmem:[#allocation3 + $0xc0] sm:$0xff] %v637
          %681 = vst [vmem:[#allocation3 + $0xc8] sm:$0xff] %v639
          %682 = vst [vmem:[#allocation3 + $0xd0] sm:$0xff] %v642
          %683 = vst [vmem:[#allocation3 + $0xd8] sm:$0xff] %v644
          %684 = vst [vmem:[#allocation3 + $0xe0] sm:$0xff] %v647
          %685 = vst [vmem:[#allocation3 + $0xe8] sm:$0xff] %v649
          %686 = vst [vmem:[#allocation3 + $0xf0] sm:$0xff] %v652
          %687 = vst [vmem:[#allocation3 + $0xf8] sm:$0xff] %v654
        $region60: #{tpu_custom_call.1} parent=39 // pred_fallthru
          _
        %s688 = sld [smem:[#allocation6 + %s57]]
        %p689 = scmp.eq.s32.totalorder %s688, 0
        // Predicated region
        $region61: #{tpu_custom_call.1} parent=39 // pred_check
          %p690 = pneg %p689
        $region62: #{tpu_custom_call.1} parent=39 // pred_check_branch
          %692 = sbr.rel (%p690) target = $region64
        $region63: #{tpu_custom_call.1} parent=39 // pred_region
          %693 = vst [vmem:[#allocation3] sm:$0xff] %v445
          %694 = vst [vmem:[#allocation3 + $0x8] sm:$0xff] %v446
          %695 = vst [vmem:[#allocation3 + $0x10] sm:$0xff] %v447
          %696 = vst [vmem:[#allocation3 + $0x18] sm:$0xff] %v448
          %697 = vst [vmem:[#allocation3 + $0x20] sm:$0xff] %v449
          %698 = vst [vmem:[#allocation3 + $0x28] sm:$0xff] %v450
          %699 = vst [vmem:[#allocation3 + $0x30] sm:$0xff] %v451
          %700 = vst [vmem:[#allocation3 + $0x38] sm:$0xff] %v452
          %701 = vst [vmem:[#allocation3 + $0x40] sm:$0xff] %v453
          %702 = vst [vmem:[#allocation3 + $0x48] sm:$0xff] %v454
          %703 = vst [vmem:[#allocation3 + $0x50] sm:$0xff] %v455
          %704 = vst [vmem:[#allocation3 + $0x58] sm:$0xff] %v456
          %705 = vst [vmem:[#allocation3 + $0x60] sm:$0xff] %v457
          %706 = vst [vmem:[#allocation3 + $0x68] sm:$0xff] %v458
          %707 = vst [vmem:[#allocation3 + $0x70] sm:$0xff] %v459
          %708 = vst [vmem:[#allocation3 + $0x78] sm:$0xff] %v460
          %709 = vst [vmem:[#allocation3 + $0x80] sm:$0xff] %v461
          %710 = vst [vmem:[#allocation3 + $0x88] sm:$0xff] %v462
          %711 = vst [vmem:[#allocation3 + $0x90] sm:$0xff] %v463
          %712 = vst [vmem:[#allocation3 + $0x98] sm:$0xff] %v464
          %713 = vst [vmem:[#allocation3 + $0xa0] sm:$0xff] %v465
          %714 = vst [vmem:[#allocation3 + $0xa8] sm:$0xff] %v466
          %715 = vst [vmem:[#allocation3 + $0xb0] sm:$0xff] %v467
          %716 = vst [vmem:[#allocation3 + $0xb8] sm:$0xff] %v468
          %717 = vst [vmem:[#allocation3 + $0xc0] sm:$0xff] %v469
          %718 = vst [vmem:[#allocation3 + $0xc8] sm:$0xff] %v470
          %719 = vst [vmem:[#allocation3 + $0xd0] sm:$0xff] %v471
          %720 = vst [vmem:[#allocation3 + $0xd8] sm:$0xff] %v472
          %721 = vst [vmem:[#allocation3 + $0xe0] sm:$0xff] %v473
          %722 = vst [vmem:[#allocation3 + $0xe8] sm:$0xff] %v474
          %723 = vst [vmem:[#allocation3 + $0xf0] sm:$0xff] %v475
          %724 = vst [vmem:[#allocation3 + $0xf8] sm:$0xff] %v476
        $region64: #{tpu_custom_call.1} parent=39 // pred_fallthru
          _
        %v725 = vld [vmem:[%s324] sm:$0xf]
        %v726 = vld [vmem:[%s324 + $0x4] sm:$0xf]
        %v727 = vld [vmem:[%s324 + $0x8] sm:$0xf]
        %v728 = vld [vmem:[%s324 + $0xc] sm:$0xf]
        %v729 = vld [vmem:[%s324 + $0x10] sm:$0xf]
        %v730 = vld [vmem:[%s324 + $0x14] sm:$0xf]
        %v731 = vld [vmem:[%s324 + $0x18] sm:$0xf]
        %v732 = vld [vmem:[%s324 + $0x1c] sm:$0xf]
        %v733 = vld [vmem:[%s324 + $0x20] sm:$0xf]
        %v734 = vld [vmem:[%s324 + $0x24] sm:$0xf]
        %v735 = vld [vmem:[%s324 + $0x28] sm:$0xf]
        %v736 = vld [vmem:[%s324 + $0x2c] sm:$0xf]
        %v737 = vld [vmem:[%s324 + $0x30] sm:$0xf]
        %v738 = vld [vmem:[%s324 + $0x34] sm:$0xf]
        %v739 = vld [vmem:[%s324 + $0x38] sm:$0xf]
        %v740 = vld [vmem:[%s324 + $0x3c] sm:$0xf]
        %s741 = scalar_lea.vmem %s6, %s57
        %v742 = vld [vmem:[%s741] sm:$0x1]
        %v744 = vperm.slane %v742, 0
        %v762 = vunpack.c.l.b16 %v725
        %v763 = vunpack.c.l.b16 %v726
        %v764 = vunpack.c.l.b16 %v727
        %v765 = vunpack.c.l.b16 %v728
        %v766 = vunpack.c.l.b16 %v729
        %v767 = vunpack.c.l.b16 %v730
        %v768 = vunpack.c.l.b16 %v731
        %v769 = vunpack.c.l.b16 %v732
        %v770 = vunpack.c.l.b16 %v733
        %v771 = vunpack.c.l.b16 %v734
        %v772 = vunpack.c.l.b16 %v735
        %v773 = vunpack.c.l.b16 %v736
        %v774 = vunpack.c.l.b16 %v737
        %v775 = vunpack.c.l.b16 %v738
        %v776 = vunpack.c.l.b16 %v739
        %v777 = vunpack.c.l.b16 %v740
        %v778 = vpack.c.b16 %v763, %v762
        %v779 = vpack.c.b16 %v765, %v764
        %v780 = vpack.c.b16 %v767, %v766
        %v781 = vpack.c.b16 %v769, %v768
        %v782 = vpack.c.b16 %v771, %v770
        %v783 = vpack.c.b16 %v773, %v772
        %v784 = vpack.c.b16 %v775, %v774
        %v785 = vpack.c.b16 %v777, %v776
        %794 = vmatpush.bf16.msra.mxu0 %v785
        %795 = vmatpush.bf16.msra.mxu0 %v784
        %796 = vmatpush.bf16.msra.mxu0 %v783
        %797 = vmatpush.bf16.msra.mxu0 %v782
        %798 = vmatpush.bf16.msra.mxu0 %v781
        %799 = vmatpush.bf16.msra.mxu0 %v780
        %800 = vmatpush.bf16.msra.mxu0 %v779
        %801 = vmatpush.bf16.msra.mxu0 %v778
        %802 = vmatmul.bf16.gmra.mxu0 %v477
        %v803 = vpop.f32.mrf.mxu0
        %v804 = vadd.f32 %v744, %v803
        %v805 = vpop.f32.mrf.mxu0
        %v806 = vadd.f32 %v744, %v805
        %807 = vmatmul.bf16.gmra.mxu0 %v478
        %v808 = vpop.f32.mrf.mxu0
        %v809 = vadd.f32 %v744, %v808
        %v810 = vpop.f32.mrf.mxu0
        %v811 = vadd.f32 %v744, %v810
        %812 = vmatmul.bf16.gmra.mxu0 %v479
        %v813 = vpop.f32.mrf.mxu0
        %v814 = vadd.f32 %v744, %v813
        %v815 = vpop.f32.mrf.mxu0
        %v816 = vadd.f32 %v744, %v815
        %817 = vmatmul.bf16.gmra.mxu0 %v480
        %v818 = vpop.f32.mrf.mxu0
        %v819 = vadd.f32 %v744, %v818
        %v820 = vpop.f32.mrf.mxu0
        %v821 = vadd.f32 %v744, %v820
        %822 = vmatmul.bf16.gmra.mxu0 %v481
        %v823 = vpop.f32.mrf.mxu0
        %v824 = vadd.f32 %v744, %v823
        %v825 = vpop.f32.mrf.mxu0
        %v826 = vadd.f32 %v744, %v825
        %827 = vmatmul.bf16.gmra.mxu0 %v482
        %v828 = vpop.f32.mrf.mxu0
        %v829 = vadd.f32 %v744, %v828
        %v830 = vpop.f32.mrf.mxu0
        %v831 = vadd.f32 %v744, %v830
        %832 = vmatmul.bf16.gmra.mxu0 %v483
        %v833 = vpop.f32.mrf.mxu0
        %v834 = vadd.f32 %v744, %v833
        %v835 = vpop.f32.mrf.mxu0
        %v836 = vadd.f32 %v744, %v835
        %837 = vmatmul.bf16.gmra.mxu0 %v484
        %v838 = vpop.f32.mrf.mxu0
        %v839 = vadd.f32 %v744, %v838
        %v840 = vpop.f32.mrf.mxu0
        %v841 = vadd.f32 %v744, %v840
        %842 = vmatmul.bf16.gmra.mxu0 %v485
        %v843 = vpop.f32.mrf.mxu0
        %v844 = vadd.f32 %v744, %v843
        %v845 = vpop.f32.mrf.mxu0
        %v846 = vadd.f32 %v744, %v845
        %847 = vmatmul.bf16.gmra.mxu0 %v486
        %v848 = vpop.f32.mrf.mxu0
        %v849 = vadd.f32 %v744, %v848
        %v850 = vpop.f32.mrf.mxu0
        %v851 = vadd.f32 %v744, %v850
        %852 = vmatmul.bf16.gmra.mxu0 %v487
        %v853 = vpop.f32.mrf.mxu0
        %v854 = vadd.f32 %v744, %v853
        %v855 = vpop.f32.mrf.mxu0
        %v856 = vadd.f32 %v744, %v855
        %857 = vmatmul.bf16.gmra.mxu0 %v488
        %v858 = vpop.f32.mrf.mxu0
        %v859 = vadd.f32 %v744, %v858
        %v860 = vpop.f32.mrf.mxu0
        %v861 = vadd.f32 %v744, %v860
        %862 = vmatmul.bf16.gmra.mxu0 %v489
        %v863 = vpop.f32.mrf.mxu0
        %v864 = vadd.f32 %v744, %v863
        %v865 = vpop.f32.mrf.mxu0
        %v866 = vadd.f32 %v744, %v865
        %867 = vmatmul.bf16.gmra.mxu0 %v490
        %v868 = vpop.f32.mrf.mxu0
        %v869 = vadd.f32 %v744, %v868
        %v870 = vpop.f32.mrf.mxu0
        %v871 = vadd.f32 %v744, %v870
        %872 = vmatmul.bf16.gmra.mxu0 %v491
        %v873 = vpop.f32.mrf.mxu0
        %v874 = vadd.f32 %v744, %v873
        %v875 = vpop.f32.mrf.mxu0
        %v876 = vadd.f32 %v744, %v875
        %877 = vmatmul.bf16.gmra.mxu0 %v492
        %v878 = vpop.f32.mrf.mxu0
        %v879 = vadd.f32 %v744, %v878
        %v880 = vpop.f32.mrf.mxu0
        %v881 = vadd.f32 %v744, %v880
        %882 = vdwg.mxu0
        %v883 = vld [vmem:[#allocation3] sm:$0xff]
        %v884 = vld [vmem:[#allocation3 + $0x8] sm:$0xff]
        %v885 = vld [vmem:[#allocation3 + $0x10] sm:$0xff]
        %v886 = vld [vmem:[#allocation3 + $0x18] sm:$0xff]
        %v887 = vld [vmem:[#allocation3 + $0x20] sm:$0xff]
        %v888 = vld [vmem:[#allocation3 + $0x28] sm:$0xff]
        %v889 = vld [vmem:[#allocation3 + $0x30] sm:$0xff]
        %v890 = vld [vmem:[#allocation3 + $0x38] sm:$0xff]
        %v891 = vld [vmem:[#allocation3 + $0x40] sm:$0xff]
        %v892 = vld [vmem:[#allocation3 + $0x48] sm:$0xff]
        %v893 = vld [vmem:[#allocation3 + $0x50] sm:$0xff]
        %v894 = vld [vmem:[#allocation3 + $0x58] sm:$0xff]
        %v895 = vld [vmem:[#allocation3 + $0x60] sm:$0xff]
        %v896 = vld [vmem:[#allocation3 + $0x68] sm:$0xff]
        %v897 = vld [vmem:[#allocation3 + $0x70] sm:$0xff]
        %v898 = vld [vmem:[#allocation3 + $0x78] sm:$0xff]
        %v899 = vld [vmem:[#allocation3 + $0x80] sm:$0xff]
        %v900 = vld [vmem:[#allocation3 + $0x88] sm:$0xff]
        %v901 = vld [vmem:[#allocation3 + $0x90] sm:$0xff]
        %v902 = vld [vmem:[#allocation3 + $0x98] sm:$0xff]
        %v903 = vld [vmem:[#allocation3 + $0xa0] sm:$0xff]
        %v904 = vld [vmem:[#allocation3 + $0xa8] sm:$0xff]
        %v905 = vld [vmem:[#allocation3 + $0xb0] sm:$0xff]
        %v906 = vld [vmem:[#allocation3 + $0xb8] sm:$0xff]
        %v907 = vld [vmem:[#allocation3 + $0xc0] sm:$0xff]
        %v908 = vld [vmem:[#allocation3 + $0xc8] sm:$0xff]
        %v909 = vld [vmem:[#allocation3 + $0xd0] sm:$0xff]
        %v910 = vld [vmem:[#allocation3 + $0xd8] sm:$0xff]
        %v911 = vld [vmem:[#allocation3 + $0xe0] sm:$0xff]
        %v912 = vld [vmem:[#allocation3 + $0xe8] sm:$0xff]
        %v913 = vld [vmem:[#allocation3 + $0xf0] sm:$0xff]
        %v914 = vld [vmem:[#allocation3 + $0xf8] sm:$0xff]
        %v915 = vadd.f32 %v804, %v883
        %v916 = vadd.f32 %v806, %v884
        %v917 = vadd.f32 %v809, %v885
        %v918 = vadd.f32 %v811, %v886
        %v919 = vadd.f32 %v814, %v887
        %v920 = vadd.f32 %v816, %v888
        %v921 = vadd.f32 %v819, %v889
        %v922 = vadd.f32 %v821, %v890
        %v923 = vadd.f32 %v824, %v891
        %v924 = vadd.f32 %v826, %v892
        %v925 = vadd.f32 %v829, %v893
        %v926 = vadd.f32 %v831, %v894
        %v927 = vadd.f32 %v834, %v895
        %v928 = vadd.f32 %v836, %v896
        %v929 = vadd.f32 %v839, %v897
        %v930 = vadd.f32 %v841, %v898
        %v931 = vadd.f32 %v844, %v899
        %v932 = vadd.f32 %v846, %v900
        %v933 = vadd.f32 %v849, %v901
        %v934 = vadd.f32 %v851, %v902
        %v935 = vadd.f32 %v854, %v903
        %v936 = vadd.f32 %v856, %v904
        %v937 = vadd.f32 %v859, %v905
        %v938 = vadd.f32 %v861, %v906
        %v939 = vadd.f32 %v864, %v907
        %v940 = vadd.f32 %v866, %v908
        %v941 = vadd.f32 %v869, %v909
        %v942 = vadd.f32 %v871, %v910
        %v943 = vadd.f32 %v874, %v911
        %v944 = vadd.f32 %v876, %v912
        %v945 = vadd.f32 %v879, %v913
        %v946 = vadd.f32 %v881, %v914
        %s947 = smul.u32 %s57, 128
        %s948 = sld [smem:[#allocation8 + %s947]]
        %s949 = sadd.s32 %s947, 1
        %s950 = sld [smem:[#allocation8 + %s949]]
        %vm951 = vcmp.gt.f32.partialorder %v915, 0.0
        %vm952 = vcmp.gt.f32.partialorder %v916, 0.0
        %vm953 = vcmp.gt.f32.partialorder %v917, 0.0
        %vm954 = vcmp.gt.f32.partialorder %v918, 0.0
        %vm955 = vcmp.gt.f32.partialorder %v919, 0.0
        %vm956 = vcmp.gt.f32.partialorder %v920, 0.0
        %vm957 = vcmp.gt.f32.partialorder %v921, 0.0
        %vm958 = vcmp.gt.f32.partialorder %v922, 0.0
        %vm959 = vcmp.gt.f32.partialorder %v923, 0.0
        %vm960 = vcmp.gt.f32.partialorder %v924, 0.0
        %vm961 = vcmp.gt.f32.partialorder %v925, 0.0
        %vm962 = vcmp.gt.f32.partialorder %v926, 0.0
        %vm963 = vcmp.gt.f32.partialorder %v927, 0.0
        %vm964 = vcmp.gt.f32.partialorder %v928, 0.0
        %vm965 = vcmp.gt.f32.partialorder %v929, 0.0
        %vm966 = vcmp.gt.f32.partialorder %v930, 0.0
        %vm967 = vcmp.gt.f32.partialorder %v931, 0.0
        %vm968 = vcmp.gt.f32.partialorder %v932, 0.0
        %vm969 = vcmp.gt.f32.partialorder %v933, 0.0
        %vm970 = vcmp.gt.f32.partialorder %v934, 0.0
        %vm971 = vcmp.gt.f32.partialorder %v935, 0.0
        %vm972 = vcmp.gt.f32.partialorder %v936, 0.0
        %vm973 = vcmp.gt.f32.partialorder %v937, 0.0
        %vm974 = vcmp.gt.f32.partialorder %v938, 0.0
        %vm975 = vcmp.gt.f32.partialorder %v939, 0.0
        %vm976 = vcmp.gt.f32.partialorder %v940, 0.0
        %vm977 = vcmp.gt.f32.partialorder %v941, 0.0
        %vm978 = vcmp.gt.f32.partialorder %v942, 0.0
        %vm979 = vcmp.gt.f32.partialorder %v943, 0.0
        %vm980 = vcmp.gt.f32.partialorder %v944, 0.0
        %vm981 = vcmp.gt.f32.partialorder %v945, 0.0
        %vm982 = vcmp.gt.f32.partialorder %v946, 0.0
        %s983 = smul.f32 %s948, 0.01
        %v984 = vstv %s948
        %v985 = vstv %s983
        %v986 = vsel %vm951, %v984, %v985
        %v987 = vsel %vm952, %v984, %v985
        %v988 = vsel %vm953, %v984, %v985
        %v989 = vsel %vm954, %v984, %v985
        %v990 = vsel %vm955, %v984, %v985
        %v991 = vsel %vm956, %v984, %v985
        %v992 = vsel %vm957, %v984, %v985
        %v993 = vsel %vm958, %v984, %v985
        %v994 = vsel %vm959, %v984, %v985
        %v995 = vsel %vm960, %v984, %v985
        %v996 = vsel %vm961, %v984, %v985
        %v997 = vsel %vm962, %v984, %v985
        %v998 = vsel %vm963, %v984, %v985
        %v999 = vsel %vm964, %v984, %v985
        %v1000 = vsel %vm965, %v984, %v985
        %v1001 = vsel %vm966, %v984, %v985
        %v1002 = vsel %vm967, %v984, %v985
        %v1003 = vsel %vm968, %v984, %v985
        %v1004 = vsel %vm969, %v984, %v985
        %v1005 = vsel %vm970, %v984, %v985
        %v1006 = vsel %vm971, %v984, %v985
        %v1007 = vsel %vm972, %v984, %v985
        %v1008 = vsel %vm973, %v984, %v985
        %v1009 = vsel %vm974, %v984, %v985
        %v1010 = vsel %vm975, %v984, %v985
        %v1011 = vsel %vm976, %v984, %v985
        %v1012 = vsel %vm977, %v984, %v985
        %v1013 = vsel %vm978, %v984, %v985
        %v1014 = vsel %vm979, %v984, %v985
        %v1015 = vsel %vm980, %v984, %v985
        %v1016 = vsel %vm981, %v984, %v985
        %v1017 = vsel %vm982, %v984, %v985
        %v1018 = vmul.f32 %v915, %v986
        %v1019 = vmul.f32 %v916, %v987
        %v1020 = vmul.f32 %v917, %v988
        %v1021 = vmul.f32 %v918, %v989
        %v1022 = vmul.f32 %v919, %v990
        %v1023 = vmul.f32 %v920, %v991
        %v1024 = vmul.f32 %v921, %v992
        %v1025 = vmul.f32 %v922, %v993
        %v1026 = vmul.f32 %v923, %v994
        %v1027 = vmul.f32 %v924, %v995
        %v1028 = vmul.f32 %v925, %v996
        %v1029 = vmul.f32 %v926, %v997
        %v1030 = vmul.f32 %v927, %v998
        %v1031 = vmul.f32 %v928, %v999
        %v1032 = vmul.f32 %v929, %v1000
        %v1033 = vmul.f32 %v930, %v1001
        %v1034 = vmul.f32 %v931, %v1002
        %v1035 = vmul.f32 %v932, %v1003
        %v1036 = vmul.f32 %v933, %v1004
        %v1037 = vmul.f32 %v934, %v1005
        %v1038 = vmul.f32 %v935, %v1006
        %v1039 = vmul.f32 %v936, %v1007
        %v1040 = vmul.f32 %v937, %v1008
        %v1041 = vmul.f32 %v938, %v1009
        %v1042 = vmul.f32 %v939, %v1010
        %v1043 = vmul.f32 %v940, %v1011
        %v1044 = vmul.f32 %v941, %v1012
        %v1045 = vmul.f32 %v942, %v1013
        %v1046 = vmul.f32 %v943, %v1014
        %v1047 = vmul.f32 %v944, %v1015
        %v1048 = vmul.f32 %v945, %v1016
        %v1049 = vmul.f32 %v946, %v1017
        %v1050 = vstv %s950
        %v1051 = vmul.f32 %v1050, %v883
        %v1052 = vmul.f32 %v1050, %v884
        %v1053 = vmul.f32 %v1050, %v885
        %v1054 = vmul.f32 %v1050, %v886
        %v1055 = vmul.f32 %v1050, %v887
        %v1056 = vmul.f32 %v1050, %v888
        %v1057 = vmul.f32 %v1050, %v889
        %v1058 = vmul.f32 %v1050, %v890
        %v1059 = vmul.f32 %v1050, %v891
        %v1060 = vmul.f32 %v1050, %v892
        %v1061 = vmul.f32 %v1050, %v893
        %v1062 = vmul.f32 %v1050, %v894
        %v1063 = vmul.f32 %v1050, %v895
        %v1064 = vmul.f32 %v1050, %v896
        %v1065 = vmul.f32 %v1050, %v897
        %v1066 = vmul.f32 %v1050, %v898
        %v1067 = vmul.f32 %v1050, %v899
        %v1068 = vmul.f32 %v1050, %v900
        %v1069 = vmul.f32 %v1050, %v901
        %v1070 = vmul.f32 %v1050, %v902
        %v1071 = vmul.f32 %v1050, %v903
        %v1072 = vmul.f32 %v1050, %v904
        %v1073 = vmul.f32 %v1050, %v905
        %v1074 = vmul.f32 %v1050, %v906
        %v1075 = vmul.f32 %v1050, %v907
        %v1076 = vmul.f32 %v1050, %v908
        %v1077 = vmul.f32 %v1050, %v909
        %v1078 = vmul.f32 %v1050, %v910
        %v1079 = vmul.f32 %v1050, %v911
        %v1080 = vmul.f32 %v1050, %v912
        %v1081 = vmul.f32 %v1050, %v913
        %v1082 = vmul.f32 %v1050, %v914
        %v1083 = vadd.f32 %v1018, %v1051
        %v1084 = vadd.f32 %v1019, %v1052
        %v1085 = vadd.f32 %v1020, %v1053
        %v1086 = vadd.f32 %v1021, %v1054
        %v1087 = vadd.f32 %v1022, %v1055
        %v1088 = vadd.f32 %v1023, %v1056
        %v1089 = vadd.f32 %v1024, %v1057
        %v1090 = vadd.f32 %v1025, %v1058
        %v1091 = vadd.f32 %v1026, %v1059
        %v1092 = vadd.f32 %v1027, %v1060
        %v1093 = vadd.f32 %v1028, %v1061
        %v1094 = vadd.f32 %v1029, %v1062
        %v1095 = vadd.f32 %v1030, %v1063
        %v1096 = vadd.f32 %v1031, %v1064
        %v1097 = vadd.f32 %v1032, %v1065
        %v1098 = vadd.f32 %v1033, %v1066
        %v1099 = vadd.f32 %v1034, %v1067
        %v1100 = vadd.f32 %v1035, %v1068
        %v1101 = vadd.f32 %v1036, %v1069
        %v1102 = vadd.f32 %v1037, %v1070
        %v1103 = vadd.f32 %v1038, %v1071
        %v1104 = vadd.f32 %v1039, %v1072
        %v1105 = vadd.f32 %v1040, %v1073
        %v1106 = vadd.f32 %v1041, %v1074
        %v1107 = vadd.f32 %v1042, %v1075
        %v1108 = vadd.f32 %v1043, %v1076
        %v1109 = vadd.f32 %v1044, %v1077
        %v1110 = vadd.f32 %v1045, %v1078
        %v1111 = vadd.f32 %v1046, %v1079
        %v1112 = vadd.f32 %v1047, %v1080
        %v1113 = vadd.f32 %v1048, %v1081
        %v1114 = vadd.f32 %v1049, %v1082
        %1115 = vst [vmem:[#allocation2] sm:$0xff] %v1083
        %1116 = vst [vmem:[#allocation2 + $0x8] sm:$0xff] %v1084
        %1117 = vst [vmem:[#allocation2 + $0x10] sm:$0xff] %v1085
        %1118 = vst [vmem:[#allocation2 + $0x18] sm:$0xff] %v1086
        %1119 = vst [vmem:[#allocation2 + $0x20] sm:$0xff] %v1087
        %1120 = vst [vmem:[#allocation2 + $0x28] sm:$0xff] %v1088
        %1121 = vst [vmem:[#allocation2 + $0x30] sm:$0xff] %v1089
        %1122 = vst [vmem:[#allocation2 + $0x38] sm:$0xff] %v1090
        %1123 = vst [vmem:[#allocation2 + $0x40] sm:$0xff] %v1091
        %1124 = vst [vmem:[#allocation2 + $0x48] sm:$0xff] %v1092
        %1125 = vst [vmem:[#allocation2 + $0x50] sm:$0xff] %v1093
        %1126 = vst [vmem:[#allocation2 + $0x58] sm:$0xff] %v1094
        %1127 = vst [vmem:[#allocation2 + $0x60] sm:$0xff] %v1095
        %1128 = vst [vmem:[#allocation2 + $0x68] sm:$0xff] %v1096
        %1129 = vst [vmem:[#allocation2 + $0x70] sm:$0xff] %v1097
        %1130 = vst [vmem:[#allocation2 + $0x78] sm:$0xff] %v1098
        %1131 = vst [vmem:[#allocation2 + $0x80] sm:$0xff] %v1099
        %1132 = vst [vmem:[#allocation2 + $0x88] sm:$0xff] %v1100
        %1133 = vst [vmem:[#allocation2 + $0x90] sm:$0xff] %v1101
        %1134 = vst [vmem:[#allocation2 + $0x98] sm:$0xff] %v1102
        %1135 = vst [vmem:[#allocation2 + $0xa0] sm:$0xff] %v1103
        %1136 = vst [vmem:[#allocation2 + $0xa8] sm:$0xff] %v1104
        %1137 = vst [vmem:[#allocation2 + $0xb0] sm:$0xff] %v1105
        %1138 = vst [vmem:[#allocation2 + $0xb8] sm:$0xff] %v1106
        %1139 = vst [vmem:[#allocation2 + $0xc0] sm:$0xff] %v1107
        %1140 = vst [vmem:[#allocation2 + $0xc8] sm:$0xff] %v1108
        %1141 = vst [vmem:[#allocation2 + $0xd0] sm:$0xff] %v1109
        %1142 = vst [vmem:[#allocation2 + $0xd8] sm:$0xff] %v1110
        %1143 = vst [vmem:[#allocation2 + $0xe0] sm:$0xff] %v1111
        %1144 = vst [vmem:[#allocation2 + $0xe8] sm:$0xff] %v1112
        %1145 = vst [vmem:[#allocation2 + $0xf0] sm:$0xff] %v1113
        %1146 = vst [vmem:[#allocation2 + $0xf8] sm:$0xff] %v1114
        %s1147 = sld [smem:[#allocation7 + %s57]]
        %p1148 = scmp.eq.s32.totalorder %s1147, 1
        // Predicated region
        $region65: #{tpu_custom_call.1} parent=39 // pred_check
          %p1149 = pneg %p1148
        $region66: #{tpu_custom_call.1} parent=39 // pred_check_branch
          %1151 = sbr.rel (%p1149) target = $region68
        $region67: #{tpu_custom_call.1} parent=39 // pred_region
          %1152 = vst [vmem:[%s371] sm:$0xff] %v1083
          %1153 = vst [vmem:[%s371 + $0x8] sm:$0xff] %v1084
          %1154 = vst [vmem:[%s371 + $0x10] sm:$0xff] %v1085
          %1155 = vst [vmem:[%s371 + $0x18] sm:$0xff] %v1086
          %1156 = vst [vmem:[%s371 + $0x20] sm:$0xff] %v1087
          %1157 = vst [vmem:[%s371 + $0x28] sm:$0xff] %v1088
          %1158 = vst [vmem:[%s371 + $0x30] sm:$0xff] %v1089
          %1159 = vst [vmem:[%s371 + $0x38] sm:$0xff] %v1090
          %1160 = vst [vmem:[%s371 + $0x40] sm:$0xff] %v1091
          %1161 = vst [vmem:[%s371 + $0x48] sm:$0xff] %v1092
          %1162 = vst [vmem:[%s371 + $0x50] sm:$0xff] %v1093
          %1163 = vst [vmem:[%s371 + $0x58] sm:$0xff] %v1094
          %1164 = vst [vmem:[%s371 + $0x60] sm:$0xff] %v1095
          %1165 = vst [vmem:[%s371 + $0x68] sm:$0xff] %v1096
          %1166 = vst [vmem:[%s371 + $0x70] sm:$0xff] %v1097
          %1167 = vst [vmem:[%s371 + $0x78] sm:$0xff] %v1098
          %1168 = vst [vmem:[%s371 + $0x80] sm:$0xff] %v1099
          %1169 = vst [vmem:[%s371 + $0x88] sm:$0xff] %v1100
          %1170 = vst [vmem:[%s371 + $0x90] sm:$0xff] %v1101
          %1171 = vst [vmem:[%s371 + $0x98] sm:$0xff] %v1102
          %1172 = vst [vmem:[%s371 + $0xa0] sm:$0xff] %v1103
          %1173 = vst [vmem:[%s371 + $0xa8] sm:$0xff] %v1104
          %1174 = vst [vmem:[%s371 + $0xb0] sm:$0xff] %v1105
          %1175 = vst [vmem:[%s371 + $0xb8] sm:$0xff] %v1106
          %1176 = vst [vmem:[%s371 + $0xc0] sm:$0xff] %v1107
          %1177 = vst [vmem:[%s371 + $0xc8] sm:$0xff] %v1108
          %1178 = vst [vmem:[%s371 + $0xd0] sm:$0xff] %v1109
          %1179 = vst [vmem:[%s371 + $0xd8] sm:$0xff] %v1110
          %1180 = vst [vmem:[%s371 + $0xe0] sm:$0xff] %v1111
          %1181 = vst [vmem:[%s371 + $0xe8] sm:$0xff] %v1112
          %1182 = vst [vmem:[%s371 + $0xf0] sm:$0xff] %v1113
          %1183 = vst [vmem:[%s371 + $0xf8] sm:$0xff] %v1114
        $region68: #{tpu_custom_call.1} parent=39 // pred_fallthru
          _
        %s1184 = sand.u32 %s198, 1
        %s1185 = scalar_lea.sflag [#allocation11], %s1184
        %s1186 = sand.u32 %s198, 1
        %s1187 = smul.addr %s1186, 256
        %s1188 = scalar_lea.vmem [#allocation15], %s1187
        // Predicated region
        $region69: #{tpu_custom_call.1} parent=39 // pred_check
          %p1189 = pneg %p208
        $region70: #{tpu_custom_call.1} parent=39 // pred_check_branch
          %1191 = sbr.rel (%p1189) target = $region72
        $region71: #{tpu_custom_call.1} parent=39 // pred_region
          %s1192 = sld [smem:[#allocation5 + %s57]]
          %s1193 = smul.u32 32, %s56
          %1195 = vsyncadd %s1185, 0
          %s1196 = smul.addr %s1192, 64
          %s1197 = sadd.s32 %s1193, %s1196
          %s1198 = smul.addr %s1197, 8
          %s1199 = scalar_lea.hbm %s9, %s1198
          %s1200 = sshll.u32 %s1188, 4
          %s1201 = int_to_ptr.vmem [resolvable:$true] %s1200
          %s1202 = sshll.u32 %s1199, 4
          %s1203 = int_to_ptr.hbm [resolvable:$true] %s1202
          %1208 = dma.vmem_to_hbm [thread:$0]  %s1201, 4096, %s1203, %s1185, 128, 128, 8
        $region72: #{tpu_custom_call.1} parent=39 // pred_fallthru
          _
      $region40: #{tpu_custom_call.1} parent=5 // pred_fallthru
        _
      %p1209 = scmp.le.s32.totalorder 2, %s47
      // Predicated region
      $region73: #{tpu_custom_call.1} parent=5 // pred_check
        %p1210 = pneg %p1209
      $region74: #{tpu_custom_call.1} parent=5 // pred_check_branch
        %1212 = sbr.rel (%p1210) target = $region76
      $region75: #{tpu_custom_call.1} parent=5 // pred_region
        %s1213 = ssub.s32 %s47, 2
        // Predicated region
        $region77: #{tpu_custom_call.1} parent=75 // pred_check
          %p1214 = pneg %p214
        $region78: #{tpu_custom_call.1} parent=75 // pred_check_branch
          %1216 = sbr.rel (%p1214) target = $region80
        $region79: #{tpu_custom_call.1} parent=75 // pred_region
          %s1217 = sand.u32 %s199, 1
          %s1218 = scalar_lea.sflag [#allocation11], %s1217
          %s1219 = sand.u32 %s199, 1
          %s1220 = smul.addr %s1219, 256
          %s1221 = scalar_lea.vmem [#allocation15], %s1220
          %1223 = dma.done %s1218, 4096
        $region80: #{tpu_custom_call.1} parent=75 // pred_fallthru
          _
      $region76: #{tpu_custom_call.1} parent=5 // pred_fallthru
        _
    $region6: #{tpu_custom_call.1} parent=1 // loop_footer
      %s51 = sadd.s32 1, %s47
    $region7: #{tpu_custom_call.1} parent=1 // loop_footer_branch
      %46 = sbr.rel target = $region3
    $region8: #{tpu_custom_call.1} parent=1 // loop_exit
      _
    %1224 = vsyncpa [#allocation10], 1
    %s1225 = scalar_lea.sflag [#allocation10], 1
    %1226 = vsyncpa %s1225, 1
    %1227 = vsyncpa [#allocation13], 1
    %s1228 = scalar_lea.sflag [#allocation13], 1
    %1229 = vsyncpa %s1228, 1
    %1230 = vsyncpa [#allocation11], 1
    %s1231 = scalar_lea.sflag [#allocation11], 1
    %1232 = vsyncpa %s1231, 1

</llo_original>
